<compile_context>
chip_gen: v7x
topology: tpu7x:2x2x1
jax: 0.10.0
libtpu: 0.0.40
codegen_flags: <defaults>
</compile_context>

<pallas_src>
import math

import jax
import jax.numpy as jnp
from jax.experimental import pallas as pl
from jax.experimental.pallas import tpu as pltpu

_LANE = 128


def _round_up(n, m):
    return ((n + m - 1) // m) * m


# ----------------------------- Pallas kernel -----------------------------


def _causal_conv_matmul(x, w_flat, b, dilation, ksize):
    """Causal dilated conv as a single fused-K MXU matmul.

    x: (Bt, T, Cin) f32, w_flat: (k*Cin, N) bf16, b: (1, N) f32 -> (Bt, T, N) f32.
    The im2col buffer is built in bf16 (pad + shifted views + lane concat all bf16).
    """
    bt, t, cin = x.shape
    n = w_flat.shape[1]
    pad = (ksize - 1) * dilation
    xb = x.astype(jnp.bfloat16)
    # Pad time once on the left; tap j then reads xp[:, t + j*d, :] == x[:, t - (k-1-j)*d, :].
    xp = jnp.concatenate([jnp.zeros((bt, pad, cin), jnp.bfloat16), xb], axis=1)
    views = [xp[:, j * dilation: j * dilation + t, :] for j in range(ksize)]
    xk = jnp.concatenate(views, axis=-1).reshape(bt * t, ksize * cin)
    y = jnp.dot(xk, w_flat, preferred_element_type=jnp.float32) + b
    return y.reshape(bt, t, n)


def _make_fused_kernel(layer_meta, ksize, t_real, return_cls):
    def kernel(x_ref, *refs):
        o_ref = refs[-1]
        wrefs = refs[:-1]

        x = x_ref[...].astype(jnp.float32)          # (Bt, Tpad, Cin0_pad), lane-dense
        bt, tpad, _ = x.shape

        wi = 0
        for meta in layer_meta:                     # static Python loop over TCN blocks
            d = meta["dilation"]
            cout_p = meta["cout_pad"]
            w1 = wrefs[wi][...]
            b1 = wrefs[wi + 1][...]
            w2 = wrefs[wi + 2][...]
            b2 = wrefs[wi + 3][...]
            wi += 4

            # conv1 (+ folded 1x1 downsample when present): one matmul, N = Cout or 2*Cout.
            y1 = _causal_conv_matmul(x, w1, b1, d, ksize)
            if meta["has_ds"]:
                h1 = jnp.maximum(y1[..., :cout_p], 0.0)
                res = y1[..., cout_p:]
            else:
                h1 = jnp.maximum(y1, 0.0)
                res = x
            # TODO(synk): nn.Dropout is identity in eval mode; training-mode dropout not implemented.
            h2 = jnp.maximum(_causal_conv_matmul(h1, w2, b2, d, ksize), 0.0)
            x = h2 + res                            # activation stays VMEM/vreg resident

        # TODO(synk): for very long T on v7x (64 MiB VMEM), tile the time axis in-kernel with
        # a (k-1)*d causal halo instead of shrinking bt.
        if return_cls:
            # AdaptiveAvgPool1d(1): mean over the T valid time rows (mask padded rows).
            if tpad > t_real:
                t_idx = jax.lax.broadcasted_iota(jnp.int32, (bt, tpad, 1), 1)
                x = jnp.where(t_idx < t_real, x, 0.0)
            o_ref[...] = (jnp.sum(x, axis=1) * (1.0 / t_real))[None].astype(o_ref.dtype)
        else:
            o_ref[...] = x.astype(o_ref.dtype)

    return kernel


# ----------------------------- wrapper / params -----------------------------


def _pad_to(a, shape):
    return jnp.pad(a, [(0, s - d) for d, s in zip(a.shape, shape)])


def _prep_params(params, ksize, input_dim):
    """Zero-pad channels to 128 lanes, flatten conv weights to (k*Cin_pad, N) bf16.

    When a block has a 1x1 downsample, its weight is folded into conv1's matmul as extra
    output columns (placed on the zero-shift tap rows), so the residual projection rides
    the same fused-K matmul.
    """
    prepped = []
    layer_meta = []
    cin = input_dim
    for i, p in enumerate(params):
        cout = p["w1"].shape[2]
        cin_p = _round_up(cin, _LANE)
        cout_p = _round_up(cout, _LANE)
        has_ds = "wd" in p
        layer_meta.append(dict(dilation=2 ** i, has_ds=has_ds,
                               cin_pad=cin_p, cout_pad=cout_p))
        w1 = _pad_to(p["w1"], (ksize, cin_p, cout_p)).reshape(ksize * cin_p, cout_p)
        b1 = _pad_to(p["b1"], (1, cout_p))
        if has_ds:
            wd = _pad_to(p["wd"], (cin_p, cout_p))
            wd_rows = jnp.concatenate(
                [jnp.zeros(((ksize - 1) * cin_p, cout_p), wd.dtype), wd], axis=0)
            w1 = jnp.concatenate([w1, wd_rows], axis=1)            # (k*Cin_p, 2*Cout_p)
            b1 = jnp.concatenate([b1, _pad_to(p["bd"], (1, cout_p))], axis=1)
        w2 = _pad_to(p["w2"], (ksize, cout_p, cout_p)).reshape(ksize * cout_p, cout_p)
        b2 = _pad_to(p["b2"], (1, cout_p))
        prepped += [w1.astype(jnp.bfloat16), b1.astype(jnp.float32),
                    w2.astype(jnp.bfloat16), b2.astype(jnp.float32)]
        cin = cout
    return prepped, layer_meta


def init_params(key, input_dim, num_channels, ksize):
    """Deterministic synthetic weights (Conv1d-style uniform fan-in init)."""
    params = []
    in_c = input_dim
    for i, out_c in enumerate(num_channels):
        keys = jax.random.split(jax.random.fold_in(key, i), 6)
        s1 = 1.0 / math.sqrt(in_c * ksize)
        s2 = 1.0 / math.sqrt(out_c * ksize)
        p = {
            "w1": jax.random.uniform(keys[0], (ksize, in_c, out_c), jnp.float32, -s1, s1),
            "b1": jax.random.uniform(keys[1], (1, out_c), jnp.float32, -s1, s1),
            "w2": jax.random.uniform(keys[2], (ksize, out_c, out_c), jnp.float32, -s2, s2),
            "b2": jax.random.uniform(keys[3], (1, out_c), jnp.float32, -s2, s2),
        }
        if in_c != out_c:
            sd = 1.0 / math.sqrt(in_c)
            p["wd"] = jax.random.uniform(keys[4], (in_c, out_c), jnp.float32, -sd, sd)
            p["bd"] = jax.random.uniform(keys[5], (1, out_c), jnp.float32, -sd, sd)
        params.append(p)
        in_c = out_c
    return params


def ehr_tcn_encoder(inputs, params, ksize=3, return_cls=True):
    x = inputs["pad"].astype(jnp.float32)       # (B, T, F)
    B, T, F = x.shape

    prepped, layer_meta = _prep_params(params, ksize, F)
    cin0_pad = layer_meta[0]["cin_pad"]
    c_last = params[-1]["w1"].shape[2]
    c_last_pad = layer_meta[-1]["cout_pad"]

    # Tile sizes: time -> multiple of 8 sublanes; batch tile bt chosen so that
    #   * bt * t_pad gives >= ~512 matmul rows when B allows (MXU M occupancy), and
    #   * the grid has >= 2 steps whenever B >= 2 (v7x has 2 TensorCores per chip).
    t_pad = _round_up(T, 8)
    rows_target = 512
    bt = min(B, 32, max(1, rows_target // t_pad))
    if B >= 2:
        bt = min(bt, -(-B // 2))
    bt = max(bt, 1)
    b_pad = _round_up(B, bt)
    n_grid = b_pad // bt

    # Lane-dense input: pad features to cin0_pad in HBM so the input DMA/loads are unmasked.
    x = jnp.pad(x, ((0, b_pad - B), (0, t_pad - T), (0, cin0_pad - F)))

    kernel = _make_fused_kernel(layer_meta, ksize, T, return_cls)

    in_specs = [pl.BlockSpec((bt, t_pad, cin0_pad), lambda b: (b, 0, 0))]
    # TODO(synk): weights are constant across grid steps; single-buffering them
    # (pipeline_mode=pl.Buffered(1)) would save VMEM once supported for top-level specs.
    in_specs += [pl.BlockSpec(a.shape, lambda b, _nd=a.ndim: (0,) * _nd) for a in prepped]

    if return_cls:
        out_shape = jax.ShapeDtypeStruct((n_grid, bt, c_last_pad), jnp.float32)
        out_spec = pl.BlockSpec((1, bt, c_last_pad), lambda b: (b, 0, 0))
    else:
        out_shape = jax.ShapeDtypeStruct((b_pad, t_pad, c_last_pad), jnp.float32)
        out_spec = pl.BlockSpec((bt, t_pad, c_last_pad), lambda b: (b, 0, 0))

    # Advisory cost estimate so XLA schedules surrounding ops around this fused call.
    flops = 0
    for meta in layer_meta:
        n1 = 2 * meta["cout_pad"] if meta["has_ds"] else meta["cout_pad"]
        flops += 2 * b_pad * t_pad * ksize * meta["cin_pad"] * n1
        flops += 2 * b_pad * t_pad * ksize * meta["cout_pad"] * meta["cout_pad"]
    bytes_accessed = int(x.size) * 4 + sum(int(a.size) * a.dtype.itemsize for a in prepped)
    bytes_accessed += (b_pad * c_last_pad * 4 if return_cls
                       else b_pad * t_pad * c_last_pad * 4)

    # Generation-aware scoped-VMEM limit (v5e/v6e: 128 MiB physical, v7x: 64 MiB).
    try:
        vmem_limit = min(int(pltpu.get_tpu_info().vmem_capacity_bytes) // 2,
                         64 * 1024 * 1024)
    except Exception:
        vmem_limit = 32 * 1024 * 1024

    out = pl.pallas_call(
        kernel,
        out_shape=out_shape,
        grid_spec=pltpu.PrefetchScalarGridSpec(
            num_scalar_prefetch=0,
            grid=(n_grid,),
            in_specs=in_specs,
            out_specs=out_spec,
        ),
        compiler_params=pltpu.CompilerParams(
            dimension_semantics=("parallel",),
            vmem_limit_bytes=vmem_limit,
        ),
        cost_estimate=pl.CostEstimate(flops=int(flops), transcendentals=0,
                                      bytes_accessed=int(bytes_accessed)),
    )(x, *prepped)

    if return_cls:
        return out.reshape(n_grid * bt, c_last_pad)[:B, :c_last]
    return out[:B, :T, :c_last]


# ----------------------------- pure-JAX reference -----------------------------
# Mirrors the kernel's numerics: bf16 matmul operands, f32 accumulation.


def _ref_block(x, p, d, k):
    T = x.shape[1]

    def conv(h, w, b):
        cout = w.shape[2]
        hb = h.astype(jnp.bfloat16)
        wb = w.astype(jnp.bfloat16)
        acc = jnp.zeros(h.shape[:2] + (cout,), jnp.float32)
        for j in range(k):
            shift = (k - 1 - j) * d
            if shift >= T:
                continue
            hs = jnp.pad(hb, ((0, 0), (shift, 0), (0, 0)))[:, :T, :]
            acc = acc + jnp.einsum("btc,cd->btd", hs, wb[j],
                                   preferred_element_type=jnp.float32)
        return acc + b[None, :, :]

    h1 = jnp.maximum(conv(x, p["w1"], p["b1"]), 0.0)
    h2 = jnp.maximum(conv(h1, p["w2"], p["b2"]), 0.0)
    if "wd" in p:
        res = jnp.einsum("btc,cd->btd", x.astype(jnp.bfloat16),
                         p["wd"].astype(jnp.bfloat16),
                         preferred_element_type=jnp.float32) + p["bd"][None, :, :]
    else:
        res = x
    return h2 + res


# ----------------------------- main -----------------------------

if __name__ == "__main__":
    key = jax.random.PRNGKey(0)
    B, T, F = 2, 16, 8
    num_channels = [8, 8, 16]   # small stand-in for default [64, 64, 128]
    ksize = 3

    params = init_params(jax.random.fold_in(key, 1), F, num_channels, ksize)
    x = jax.random.normal(jax.random.fold_in(key, 2), (B, T, F), jnp.float32)
    inputs = {"pad": x}

    out = ehr_tcn_encoder(inputs, params, ksize=ksize, return_cls=True)
    out = jax.block_until_ready(out)

    # correctness check against a pure-JAX reference (same bf16-operand precision)
    y = x
    for i, p in enumerate(params):
        y = _ref_block(y, p, 2 ** i, ksize)
    ref = jnp.mean(y, axis=1)

    assert out.shape == (B, num_channels[-1]), out.shape
    assert jnp.allclose(out, ref, atol=1e-2, rtol=1e-2), (out, ref)
    print("KERNEL_OK")
</pallas_src>

<mosaic_0001>
module attributes {stable_mosaic.version = 11 : i64} {
  func.func @kernel(%arg0: i32, %arg1: memref<1x16x128xf32, #tpu.memory_space<vmem>>, %arg2: memref<384x128xbf16, #tpu.memory_space<vmem>>, %arg3: memref<1x128xf32, #tpu.memory_space<vmem>>, %arg4: memref<384x128xbf16, #tpu.memory_space<vmem>>, %arg5: memref<1x128xf32, #tpu.memory_space<vmem>>, %arg6: memref<384x128xbf16, #tpu.memory_space<vmem>>, %arg7: memref<1x128xf32, #tpu.memory_space<vmem>>, %arg8: memref<384x128xbf16, #tpu.memory_space<vmem>>, %arg9: memref<1x128xf32, #tpu.memory_space<vmem>>, %arg10: memref<384x256xbf16, #tpu.memory_space<vmem>>, %arg11: memref<1x256xf32, #tpu.memory_space<vmem>>, %arg12: memref<384x128xbf16, #tpu.memory_space<vmem>>, %arg13: memref<1x128xf32, #tpu.memory_space<vmem>>, %arg14: memref<1x1x128xf32, #tpu.memory_space<vmem>>) attributes {dimension_semantics = [#tpu.dimension_semantics<parallel>], iteration_bounds = array<i64: 2>, scalar_prefetch = 0 : i64, scratch_operands = 0 : i64, tpu.core_type = #tpu.core_type<tc>, window_params = [{transform_indices = @transform_0, window_bounds = array<i64: 1, 16, 128>}, {pipeline_mode = #tpu.pipeline_mode<synchronous>, transform_indices = @transform_1, window_bounds = array<i64: 384, 128>}, {pipeline_mode = #tpu.pipeline_mode<synchronous>, transform_indices = @transform_2, window_bounds = array<i64: 1, 128>}, {pipeline_mode = #tpu.pipeline_mode<synchronous>, transform_indices = @transform_3, window_bounds = array<i64: 384, 128>}, {pipeline_mode = #tpu.pipeline_mode<synchronous>, transform_indices = @transform_4, window_bounds = array<i64: 1, 128>}, {pipeline_mode = #tpu.pipeline_mode<synchronous>, transform_indices = @transform_5, window_bounds = array<i64: 384, 128>}, {pipeline_mode = #tpu.pipeline_mode<synchronous>, transform_indices = @transform_6, window_bounds = array<i64: 1, 128>}, {pipeline_mode = #tpu.pipeline_mode<synchronous>, transform_indices = @transform_7, window_bounds = array<i64: 384, 128>}, {pipeline_mode = #tpu.pipeline_mode<synchronous>, transform_indices = @transform_8, window_bounds = array<i64: 1, 128>}, {pipeline_mode = #tpu.pipeline_mode<synchronous>, transform_indices = @transform_9, window_bounds = array<i64: 384, 256>}, {pipeline_mode = #tpu.pipeline_mode<synchronous>, transform_indices = @transform_10, window_bounds = array<i64: 1, 256>}, {pipeline_mode = #tpu.pipeline_mode<synchronous>, transform_indices = @transform_11, window_bounds = array<i64: 384, 128>}, {pipeline_mode = #tpu.pipeline_mode<synchronous>, transform_indices = @transform_12, window_bounds = array<i64: 1, 128>}, {transform_indices = @transform_13, window_bounds = array<i64: 1, 1, 128>}]} {
    %c0 = arith.constant 0 : index
    %c0_0 = arith.constant 0 : index
    %c0_1 = arith.constant 0 : index
    %0 = vector.load %arg1[%c0, %c0_0, %c0_1] : memref<1x16x128xf32, #tpu.memory_space<vmem>>, vector<1x16x128xf32>
    %c0_2 = arith.constant 0 : index
    %c0_3 = arith.constant 0 : index
    %1 = vector.load %arg2[%c0_2, %c0_3] : memref<384x128xbf16, #tpu.memory_space<vmem>>, vector<384x128xbf16>
    %c0_4 = arith.constant 0 : index
    %c0_5 = arith.constant 0 : index
    %2 = vector.load %arg3[%c0_4, %c0_5] : memref<1x128xf32, #tpu.memory_space<vmem>>, vector<1x128xf32>
    %c0_6 = arith.constant 0 : index
    %c0_7 = arith.constant 0 : index
    %3 = vector.load %arg4[%c0_6, %c0_7] : memref<384x128xbf16, #tpu.memory_space<vmem>>, vector<384x128xbf16>
    %c0_8 = arith.constant 0 : index
    %c0_9 = arith.constant 0 : index
    %4 = vector.load %arg5[%c0_8, %c0_9] : memref<1x128xf32, #tpu.memory_space<vmem>>, vector<1x128xf32>
    %5 = arith.truncf %0 : vector<1x16x128xf32> to vector<1x16x128xbf16>
    %cst = arith.constant 0.000000e+00 : bf16
    %6 = vector.broadcast %cst : bf16 to vector<1x2x128xbf16>
    %7 = tpu.concatenate %6, %5 in 1 : vector<1x2x128xbf16>, vector<1x16x128xbf16> -> vector<1x18x128xbf16>
    %8 = vector.extract_strided_slice %7 {offsets = [0, 0, 0], sizes = [1, 16, 128], strides = [1, 1, 1]} : vector<1x18x128xbf16> to vector<1x16x128xbf16>
    %9 = vector.extract_strided_slice %7 {offsets = [0, 1, 0], sizes = [1, 16, 128], strides = [1, 1, 1]} : vector<1x18x128xbf16> to vector<1x16x128xbf16>
    %10 = vector.extract_strided_slice %7 {offsets = [0, 2, 0], sizes = [1, 16, 128], strides = [1, 1, 1]} : vector<1x18x128xbf16> to vector<1x16x128xbf16>
    %11 = tpu.concatenate %8, %9, %10 in 2 : vector<1x16x128xbf16>, vector<1x16x128xbf16>, vector<1x16x128xbf16> -> vector<1x16x384xbf16>
    %12 = vector.shape_cast %11 : vector<1x16x384xbf16> to vector<16x384xbf16>
    %cst_10 = arith.constant dense<0.000000e+00> : vector<16x128xf32>
    %13 = tpu.matmul %12, %1, %cst_10 {dimension_numbers = #tpu.dot_dimension_numbers<[1], [0], [0], [1], [0, 0, 1, 1], [], []>} : vector<16x384xbf16>, vector<384x128xbf16>, vector<16x128xf32> -> vector<16x128xf32>
    %14 = vector.broadcast %2 : vector<1x128xf32> to vector<16x128xf32>
    %15 = arith.addf %13, %14 : vector<16x128xf32>
    %16 = vector.shape_cast %15 : vector<16x128xf32> to vector<1x16x128xf32>
    %cst_11 = arith.constant 0.000000e+00 : f32
    %17 = vector.broadcast %cst_11 : f32 to vector<1x16x128xf32>
    %18 = arith.maximumf %16, %17 : vector<1x16x128xf32>
    %19 = arith.truncf %18 : vector<1x16x128xf32> to vector<1x16x128xbf16>
    %cst_12 = arith.constant 0.000000e+00 : bf16
    %20 = vector.broadcast %cst_12 : bf16 to vector<1x2x128xbf16>
    %21 = tpu.concatenate %20, %19 in 1 : vector<1x2x128xbf16>, vector<1x16x128xbf16> -> vector<1x18x128xbf16>
    %22 = vector.extract_strided_slice %21 {offsets = [0, 0, 0], sizes = [1, 16, 128], strides = [1, 1, 1]} : vector<1x18x128xbf16> to vector<1x16x128xbf16>
    %23 = vector.extract_strided_slice %21 {offsets = [0, 1, 0], sizes = [1, 16, 128], strides = [1, 1, 1]} : vector<1x18x128xbf16> to vector<1x16x128xbf16>
    %24 = vector.extract_strided_slice %21 {offsets = [0, 2, 0], sizes = [1, 16, 128], strides = [1, 1, 1]} : vector<1x18x128xbf16> to vector<1x16x128xbf16>
    %25 = tpu.concatenate %22, %23, %24 in 2 : vector<1x16x128xbf16>, vector<1x16x128xbf16>, vector<1x16x128xbf16> -> vector<1x16x384xbf16>
    %26 = vector.shape_cast %25 : vector<1x16x384xbf16> to vector<16x384xbf16>
    %cst_13 = arith.constant dense<0.000000e+00> : vector<16x128xf32>
    %27 = tpu.matmul %26, %3, %cst_13 {dimension_numbers = #tpu.dot_dimension_numbers<[1], [0], [0], [1], [0, 0, 1, 1], [], []>} : vector<16x384xbf16>, vector<384x128xbf16>, vector<16x128xf32> -> vector<16x128xf32>
    %28 = vector.broadcast %4 : vector<1x128xf32> to vector<16x128xf32>
    %29 = arith.addf %27, %28 : vector<16x128xf32>
    %30 = vector.shape_cast %29 : vector<16x128xf32> to vector<1x16x128xf32>
    %cst_14 = arith.constant 0.000000e+00 : f32
    %31 = vector.broadcast %cst_14 : f32 to vector<1x16x128xf32>
    %32 = arith.maximumf %30, %31 : vector<1x16x128xf32>
    %33 = arith.addf %32, %0 : vector<1x16x128xf32>
    %c0_15 = arith.constant 0 : index
    %c0_16 = arith.constant 0 : index
    %34 = vector.load %arg6[%c0_15, %c0_16] : memref<384x128xbf16, #tpu.memory_space<vmem>>, vector<384x128xbf16>
    %c0_17 = arith.constant 0 : index
    %c0_18 = arith.constant 0 : index
    %35 = vector.load %arg7[%c0_17, %c0_18] : memref<1x128xf32, #tpu.memory_space<vmem>>, vector<1x128xf32>
    %c0_19 = arith.constant 0 : index
    %c0_20 = arith.constant 0 : index
    %36 = vector.load %arg8[%c0_19, %c0_20] : memref<384x128xbf16, #tpu.memory_space<vmem>>, vector<384x128xbf16>
    %c0_21 = arith.constant 0 : index
    %c0_22 = arith.constant 0 : index
    %37 = vector.load %arg9[%c0_21, %c0_22] : memref<1x128xf32, #tpu.memory_space<vmem>>, vector<1x128xf32>
    %38 = arith.truncf %33 : vector<1x16x128xf32> to vector<1x16x128xbf16>
    %cst_23 = arith.constant 0.000000e+00 : bf16
    %39 = vector.broadcast %cst_23 : bf16 to vector<1x4x128xbf16>
    %40 = tpu.concatenate %39, %38 in 1 : vector<1x4x128xbf16>, vector<1x16x128xbf16> -> vector<1x20x128xbf16>
    %41 = vector.extract_strided_slice %40 {offsets = [0, 0, 0], sizes = [1, 16, 128], strides = [1, 1, 1]} : vector<1x20x128xbf16> to vector<1x16x128xbf16>
    %42 = vector.extract_strided_slice %40 {offsets = [0, 2, 0], sizes = [1, 16, 128], strides = [1, 1, 1]} : vector<1x20x128xbf16> to vector<1x16x128xbf16>
    %43 = vector.extract_strided_slice %40 {offsets = [0, 4, 0], sizes = [1, 16, 128], strides = [1, 1, 1]} : vector<1x20x128xbf16> to vector<1x16x128xbf16>
    %44 = tpu.concatenate %41, %42, %43 in 2 : vector<1x16x128xbf16>, vector<1x16x128xbf16>, vector<1x16x128xbf16> -> vector<1x16x384xbf16>
    %45 = vector.shape_cast %44 : vector<1x16x384xbf16> to vector<16x384xbf16>
    %cst_24 = arith.constant dense<0.000000e+00> : vector<16x128xf32>
    %46 = tpu.matmul %45, %34, %cst_24 {dimension_numbers = #tpu.dot_dimension_numbers<[1], [0], [0], [1], [0, 0, 1, 1], [], []>} : vector<16x384xbf16>, vector<384x128xbf16>, vector<16x128xf32> -> vector<16x128xf32>
    %47 = vector.broadcast %35 : vector<1x128xf32> to vector<16x128xf32>
    %48 = arith.addf %46, %47 : vector<16x128xf32>
    %49 = vector.shape_cast %48 : vector<16x128xf32> to vector<1x16x128xf32>
    %cst_25 = arith.constant 0.000000e+00 : f32
    %50 = vector.broadcast %cst_25 : f32 to vector<1x16x128xf32>
    %51 = arith.maximumf %49, %50 : vector<1x16x128xf32>
    %52 = arith.truncf %51 : vector<1x16x128xf32> to vector<1x16x128xbf16>
    %cst_26 = arith.constant 0.000000e+00 : bf16
    %53 = vector.broadcast %cst_26 : bf16 to vector<1x4x128xbf16>
    %54 = tpu.concatenate %53, %52 in 1 : vector<1x4x128xbf16>, vector<1x16x128xbf16> -> vector<1x20x128xbf16>
    %55 = vector.extract_strided_slice %54 {offsets = [0, 0, 0], sizes = [1, 16, 128], strides = [1, 1, 1]} : vector<1x20x128xbf16> to vector<1x16x128xbf16>
    %56 = vector.extract_strided_slice %54 {offsets = [0, 2, 0], sizes = [1, 16, 128], strides = [1, 1, 1]} : vector<1x20x128xbf16> to vector<1x16x128xbf16>
    %57 = vector.extract_strided_slice %54 {offsets = [0, 4, 0], sizes = [1, 16, 128], strides = [1, 1, 1]} : vector<1x20x128xbf16> to vector<1x16x128xbf16>
    %58 = tpu.concatenate %55, %56, %57 in 2 : vector<1x16x128xbf16>, vector<1x16x128xbf16>, vector<1x16x128xbf16> -> vector<1x16x384xbf16>
    %59 = vector.shape_cast %58 : vector<1x16x384xbf16> to vector<16x384xbf16>
    %cst_27 = arith.constant dense<0.000000e+00> : vector<16x128xf32>
    %60 = tpu.matmul %59, %36, %cst_27 {dimension_numbers = #tpu.dot_dimension_numbers<[1], [0], [0], [1], [0, 0, 1, 1], [], []>} : vector<16x384xbf16>, vector<384x128xbf16>, vector<16x128xf32> -> vector<16x128xf32>
    %61 = vector.broadcast %37 : vector<1x128xf32> to vector<16x128xf32>
    %62 = arith.addf %60, %61 : vector<16x128xf32>
    %63 = vector.shape_cast %62 : vector<16x128xf32> to vector<1x16x128xf32>
    %cst_28 = arith.constant 0.000000e+00 : f32
    %64 = vector.broadcast %cst_28 : f32 to vector<1x16x128xf32>
    %65 = arith.maximumf %63, %64 : vector<1x16x128xf32>
    %66 = arith.addf %65, %33 : vector<1x16x128xf32>
    %c0_29 = arith.constant 0 : index
    %c0_30 = arith.constant 0 : index
    %67 = vector.load %arg10[%c0_29, %c0_30] : memref<384x256xbf16, #tpu.memory_space<vmem>>, vector<384x256xbf16>
    %c0_31 = arith.constant 0 : index
    %c0_32 = arith.constant 0 : index
    %68 = vector.load %arg11[%c0_31, %c0_32] : memref<1x256xf32, #tpu.memory_space<vmem>>, vector<1x256xf32>
    %c0_33 = arith.constant 0 : index
    %c0_34 = arith.constant 0 : index
    %69 = vector.load %arg12[%c0_33, %c0_34] : memref<384x128xbf16, #tpu.memory_space<vmem>>, vector<384x128xbf16>
    %c0_35 = arith.constant 0 : index
    %c0_36 = arith.constant 0 : index
    %70 = vector.load %arg13[%c0_35, %c0_36] : memref<1x128xf32, #tpu.memory_space<vmem>>, vector<1x128xf32>
    %71 = arith.truncf %66 : vector<1x16x128xf32> to vector<1x16x128xbf16>
    %cst_37 = arith.constant 0.000000e+00 : bf16
    %72 = vector.broadcast %cst_37 : bf16 to vector<1x8x128xbf16>
    %73 = tpu.concatenate %72, %71 in 1 : vector<1x8x128xbf16>, vector<1x16x128xbf16> -> vector<1x24x128xbf16>
    %74 = vector.extract_strided_slice %73 {offsets = [0, 0, 0], sizes = [1, 16, 128], strides = [1, 1, 1]} : vector<1x24x128xbf16> to vector<1x16x128xbf16>
    %75 = vector.extract_strided_slice %73 {offsets = [0, 4, 0], sizes = [1, 16, 128], strides = [1, 1, 1]} : vector<1x24x128xbf16> to vector<1x16x128xbf16>
    %76 = vector.extract_strided_slice %73 {offsets = [0, 8, 0], sizes = [1, 16, 128], strides = [1, 1, 1]} : vector<1x24x128xbf16> to vector<1x16x128xbf16>
    %77 = tpu.concatenate %74, %75, %76 in 2 : vector<1x16x128xbf16>, vector<1x16x128xbf16>, vector<1x16x128xbf16> -> vector<1x16x384xbf16>
    %78 = vector.shape_cast %77 : vector<1x16x384xbf16> to vector<16x384xbf16>
    %cst_38 = arith.constant dense<0.000000e+00> : vector<16x256xf32>
    %79 = tpu.matmul %78, %67, %cst_38 {dimension_numbers = #tpu.dot_dimension_numbers<[1], [0], [0], [1], [0, 0, 1, 1], [], []>} : vector<16x384xbf16>, vector<384x256xbf16>, vector<16x256xf32> -> vector<16x256xf32>
    %80 = vector.broadcast %68 : vector<1x256xf32> to vector<16x256xf32>
    %81 = arith.addf %79, %80 : vector<16x256xf32>
    %82 = vector.shape_cast %81 : vector<16x256xf32> to vector<1x16x256xf32>
    %83 = vector.extract_strided_slice %82 {offsets = [0, 0, 0], sizes = [1, 16, 128], strides = [1, 1, 1]} : vector<1x16x256xf32> to vector<1x16x128xf32>
    %cst_39 = arith.constant 0.000000e+00 : f32
    %84 = vector.broadcast %cst_39 : f32 to vector<1x16x128xf32>
    %85 = arith.maximumf %83, %84 : vector<1x16x128xf32>
    %86 = vector.extract_strided_slice %82 {offsets = [0, 0, 128], sizes = [1, 16, 128], strides = [1, 1, 1]} : vector<1x16x256xf32> to vector<1x16x128xf32>
    %87 = arith.truncf %85 : vector<1x16x128xf32> to vector<1x16x128xbf16>
    %cst_40 = arith.constant 0.000000e+00 : bf16
    %88 = vector.broadcast %cst_40 : bf16 to vector<1x8x128xbf16>
    %89 = tpu.concatenate %88, %87 in 1 : vector<1x8x128xbf16>, vector<1x16x128xbf16> -> vector<1x24x128xbf16>
    %90 = vector.extract_strided_slice %89 {offsets = [0, 0, 0], sizes = [1, 16, 128], strides = [1, 1, 1]} : vector<1x24x128xbf16> to vector<1x16x128xbf16>
    %91 = vector.extract_strided_slice %89 {offsets = [0, 4, 0], sizes = [1, 16, 128], strides = [1, 1, 1]} : vector<1x24x128xbf16> to vector<1x16x128xbf16>
    %92 = vector.extract_strided_slice %89 {offsets = [0, 8, 0], sizes = [1, 16, 128], strides = [1, 1, 1]} : vector<1x24x128xbf16> to vector<1x16x128xbf16>
    %93 = tpu.concatenate %90, %91, %92 in 2 : vector<1x16x128xbf16>, vector<1x16x128xbf16>, vector<1x16x128xbf16> -> vector<1x16x384xbf16>
    %94 = vector.shape_cast %93 : vector<1x16x384xbf16> to vector<16x384xbf16>
    %cst_41 = arith.constant dense<0.000000e+00> : vector<16x128xf32>
    %95 = tpu.matmul %94, %69, %cst_41 {dimension_numbers = #tpu.dot_dimension_numbers<[1], [0], [0], [1], [0, 0, 1, 1], [], []>} : vector<16x384xbf16>, vector<384x128xbf16>, vector<16x128xf32> -> vector<16x128xf32>
    %96 = vector.broadcast %70 : vector<1x128xf32> to vector<16x128xf32>
    %97 = arith.addf %95, %96 : vector<16x128xf32>
    %98 = vector.shape_cast %97 : vector<16x128xf32> to vector<1x16x128xf32>
    %cst_42 = arith.constant 0.000000e+00 : f32
    %99 = vector.broadcast %cst_42 : f32 to vector<1x16x128xf32>
    %100 = arith.maximumf %98, %99 : vector<1x16x128xf32>
    %101 = arith.addf %100, %86 : vector<1x16x128xf32>
    %cst_43 = arith.constant dense<0.000000e+00> : vector<1x128xf32>
    %102 = vector.multi_reduction <add>, %101, %cst_43 [1] : vector<1x16x128xf32> to vector<1x128xf32>
    %cst_44 = arith.constant 6.250000e-02 : f32
    %103 = vector.broadcast %cst_44 : f32 to vector<1x128xf32>
    %104 = arith.mulf %102, %103 : vector<1x128xf32>
    %105 = vector.shape_cast %104 : vector<1x128xf32> to vector<1x1x128xf32>
    %c0_45 = arith.constant 0 : index
    %c0_46 = arith.constant 0 : index
    %c0_47 = arith.constant 0 : index
    %106 = vector.load %arg14[%c0_45, %c0_46, %c0_47] : memref<1x1x128xf32, #tpu.memory_space<vmem>>, vector<1x1x128xf32>
    tpu.vector_store %arg14[%c0_45, %c0_46, %c0_47], %105 {strides = array<i32>} : memref<1x1x128xf32, #tpu.memory_space<vmem>>, vector<1x1x128xf32>,
    return
  }
  func.func @transform_0(%arg0: i32) -> (i32, i32, i32) {
    %c0_i32 = arith.constant 0 : i32
    %c0_i32_0 = arith.constant 0 : i32
    %c0_i32_1 = arith.constant 0 : i32
    return %arg0, %c0_i32, %c0_i32_0 : i32, i32, i32
  }
  func.func @transform_1(%arg0: i32) -> (i32, i32) {
    %c0_i32 = arith.constant 0 : i32
    %c0_i32_0 = arith.constant 0 : i32
    %c0_i32_1 = arith.constant 0 : i32
    return %c0_i32, %c0_i32_0 : i32, i32
  }
  func.func @transform_2(%arg0: i32) -> (i32, i32) {
    %c0_i32 = arith.constant 0 : i32
    %c0_i32_0 = arith.constant 0 : i32
    %c0_i32_1 = arith.constant 0 : i32
    return %c0_i32, %c0_i32_0 : i32, i32
  }
  func.func @transform_3(%arg0: i32) -> (i32, i32) {
    %c0_i32 = arith.constant 0 : i32
    %c0_i32_0 = arith.constant 0 : i32
    %c0_i32_1 = arith.constant 0 : i32
    return %c0_i32, %c0_i32_0 : i32, i32
  }
  func.func @transform_4(%arg0: i32) -> (i32, i32) {
    %c0_i32 = arith.constant 0 : i32
    %c0_i32_0 = arith.constant 0 : i32
    %c0_i32_1 = arith.constant 0 : i32
    return %c0_i32, %c0_i32_0 : i32, i32
  }
  func.func @transform_5(%arg0: i32) -> (i32, i32) {
    %c0_i32 = arith.constant 0 : i32
    %c0_i32_0 = arith.constant 0 : i32
    %c0_i32_1 = arith.constant 0 : i32
    return %c0_i32, %c0_i32_0 : i32, i32
  }
  func.func @transform_6(%arg0: i32) -> (i32, i32) {
    %c0_i32 = arith.constant 0 : i32
    %c0_i32_0 = arith.constant 0 : i32
    %c0_i32_1 = arith.constant 0 : i32
    return %c0_i32, %c0_i32_0 : i32, i32
  }
  func.func @transform_7(%arg0: i32) -> (i32, i32) {
    %c0_i32 = arith.constant 0 : i32
    %c0_i32_0 = arith.constant 0 : i32
    %c0_i32_1 = arith.constant 0 : i32
    return %c0_i32, %c0_i32_0 : i32, i32
  }
  func.func @transform_8(%arg0: i32) -> (i32, i32) {
    %c0_i32 = arith.constant 0 : i32
    %c0_i32_0 = arith.constant 0 : i32
    %c0_i32_1 = arith.constant 0 : i32
    return %c0_i32, %c0_i32_0 : i32, i32
  }
  func.func @transform_9(%arg0: i32) -> (i32, i32) {
    %c0_i32 = arith.constant 0 : i32
    %c0_i32_0 = arith.constant 0 : i32
    %c0_i32_1 = arith.constant 0 : i32
    return %c0_i32, %c0_i32_0 : i32, i32
  }
  func.func @transform_10(%arg0: i32) -> (i32, i32) {
    %c0_i32 = arith.constant 0 : i32
    %c0_i32_0 = arith.constant 0 : i32
    %c0_i32_1 = arith.constant 0 : i32
    return %c0_i32, %c0_i32_0 : i32, i32
  }
  func.func @transform_11(%arg0: i32) -> (i32, i32) {
    %c0_i32 = arith.constant 0 : i32
    %c0_i32_0 = arith.constant 0 : i32
    %c0_i32_1 = arith.constant 0 : i32
    return %c0_i32, %c0_i32_0 : i32, i32
  }
  func.func @transform_12(%arg0: i32) -> (i32, i32) {
    %c0_i32 = arith.constant 0 : i32
    %c0_i32_0 = arith.constant 0 : i32
    %c0_i32_1 = arith.constant 0 : i32
    return %c0_i32, %c0_i32_0 : i32, i32
  }
  func.func @transform_13(%arg0: i32) -> (i32, i32, i32) {
    %c0_i32 = arith.constant 0 : i32
    %c0_i32_0 = arith.constant 0 : i32
    %c0_i32_1 = arith.constant 0 : i32
    return %arg0, %c0_i32, %c0_i32_0 : i32, i32, i32
  }
}

</mosaic_0001>

<llo_original>
// kernel: tpu_custom_call.1
$region0: #{tpu_custom_call.1}
  #allocation0 [shape = 'u32[]', space=smem, size = 0x4, offset = 0x4, fixed_abs, tag = 'smem constant byte address 0x4 - core index']
  #allocation1 [shape = 'u32[144,128]{1,0:T(1,128)}', space=vmem, size = 0x12000, scoped, tag = 'internal scratch']
  %s0 = inlined_call_operand.hbm [shape: f32[2,16,128], index: 0, kind: input, shape index: {}]
  %s1 = inlined_call_operand.hbm [shape: bf16[384,128], index: 1, kind: input, shape index: {}]
  %s2 = inlined_call_operand.vmem [shape: f32[1,128], index: 2, kind: input, shape index: {}]
  %s3 = inlined_call_operand.hbm [shape: bf16[384,128], index: 3, kind: input, shape index: {}]
  %s4 = inlined_call_operand.vmem [shape: f32[1,128], index: 4, kind: input, shape index: {}]
  %s5 = inlined_call_operand.hbm [shape: bf16[384,128], index: 5, kind: input, shape index: {}]
  %s6 = inlined_call_operand.vmem [shape: f32[1,128], index: 6, kind: input, shape index: {}]
  %s7 = inlined_call_operand.hbm [shape: bf16[384,128], index: 7, kind: input, shape index: {}]
  %s8 = inlined_call_operand.vmem [shape: f32[1,128], index: 8, kind: input, shape index: {}]
  %s9 = inlined_call_operand.hbm [shape: bf16[384,256], index: 9, kind: input, shape index: {}]
  %s10 = inlined_call_operand.vmem [shape: f32[1,256], index: 10, kind: input, shape index: {}]
  %s11 = inlined_call_operand.hbm [shape: bf16[384,128], index: 11, kind: input, shape index: {}]
  %s12 = inlined_call_operand.vmem [shape: f32[1,128], index: 12, kind: input, shape index: {}]
  %s13 = inlined_call_operand.hbm [shape: f32[2,1,128], index: 13, kind: output, shape index: {}]
  %s14 = sld [smem:[#allocation0]]
  $region113: #{tpu_custom_call.1} parent=0
    _
  %s16 = ssub.s32 1, %s14
  %s17 = scalar_select 0, %s16, %s14
  $region1: #{tpu_custom_call.1} parent=0
    #allocation2 [shape = 'u8[16384]{0}', space=vmem, size = 0x4000, scoped, tag = 'input window, operand 0']
    #allocation3 [shape = 's32[2]{0}', space=sflag, size = 0x8, scoped, tag = 'scoped memory for tpu_custom_call.1']
    #allocation4 [shape = 's32[2]{0}', space=sflag, size = 0x8, scoped, tag = 'scoped memory for tpu_custom_call.1']
    #allocation5 [shape = 'u8[98304]{0}', space=vmem, size = 0x18000, scoped, tag = 'input window, operand 1, single buffered']
    #allocation6 [shape = 's32[1]{0}', space=sflag, size = 0x4, scoped, tag = 'scoped memory for tpu_custom_call.1']
    #allocation7 [shape = 'u8[98304]{0}', space=vmem, size = 0x18000, scoped, tag = 'input window, operand 3, single buffered']
    #allocation8 [shape = 'u8[98304]{0}', space=vmem, size = 0x18000, scoped, tag = 'input window, operand 5, single buffered']
    #allocation9 [shape = 's32[1]{0}', space=sflag, size = 0x4, scoped, tag = 'scoped memory for tpu_custom_call.1']
    #allocation10 [shape = 'u8[98304]{0}', space=vmem, size = 0x18000, scoped, tag = 'input window, operand 7, single buffered']
    #allocation11 [shape = 'u8[196608]{0}', space=vmem, size = 0x30000, scoped, tag = 'input window, operand 9, single buffered']
    #allocation12 [shape = 's32[1]{0}', space=sflag, size = 0x4, scoped, tag = 'scoped memory for tpu_custom_call.1']
    #allocation13 [shape = 'u8[98304]{0}', space=vmem, size = 0x18000, scoped, tag = 'input window, operand 11, single buffered']
    #allocation14 [shape = 'u8[1024]{0}', space=vmem, size = 0x400, scoped, tag = 'output window, operand 0']
    %18 = vsyncpa [#allocation3], 0
    %s19 = scalar_lea.sflag [#allocation3], 1
    %20 = vsyncpa %s19, 0
    %21 = vsyncpa [#allocation6], 0
    %22 = vsyncpa [#allocation9], 0
    %23 = vsyncpa [#allocation12], 0
    %24 = vsyncpa [#allocation4], 0
    %s25 = scalar_lea.sflag [#allocation4], 1
    %26 = vsyncpa %s25, 0
    loop: start=0, step=1, limit=4
    $region2: #{tpu_custom_call.1} parent=1 // loop_pre_header
      _
    $region3: #{tpu_custom_call.1} parent=1 // loop_header
      %s28 = sphi 0, %s32
      %p29 = scmp.ge.s32.totalorder %s28, 4
      %s38 = sphi 0, %s40
      %s41 = sphi 0, %s38
      %s42 = sphi 0, %s41
      %s58 = sphi 0, %s42
      %s62 = sphi 0, %s62
      %s64 = sphi 0, %s62
      %s65 = sphi 0, %s64
      %s79 = sphi 0, %s65
      %s83 = sphi 0, %s83
      %s85 = sphi 0, %s83
      %s86 = sphi 0, %s85
      %s100 = sphi 0, %s86
      %s104 = sphi 0, %s104
      %s106 = sphi 0, %s104
      %s107 = sphi 0, %s106
      %s121 = sphi 0, %s107
      %s125 = sphi 0, %s125
      %s127 = sphi 0, %s125
      %s128 = sphi 0, %s127
      %s142 = sphi 0, %s128
      %s146 = sphi 0, %s146
      %s148 = sphi 0, %s146
      %s149 = sphi 0, %s148
      %s163 = sphi 0, %s149
      %s167 = sphi 0, %s167
      %s169 = sphi 0, %s167
      %s170 = sphi 0, %s169
      %s184 = sphi 0, %s170
      %s188 = sphi 0, %s188
      %s190 = sphi 0, %s188
      %s191 = sphi 0, %s190
      %s205 = sphi 0, %s191
      %s209 = sphi 0, %s209
      %s211 = sphi 0, %s209
      %s212 = sphi 0, %s211
      %s226 = sphi 0, %s212
      %s230 = sphi 0, %s230
      %s232 = sphi 0, %s230
      %s233 = sphi 0, %s232
      %s247 = sphi 0, %s233
      %s251 = sphi 0, %s251
      %s253 = sphi 0, %s251
      %s254 = sphi 0, %s253
      %s268 = sphi 0, %s254
      %s272 = sphi 0, %s272
      %s274 = sphi 0, %s272
      %s275 = sphi 0, %s274
      %s289 = sphi 0, %s275
      %s293 = sphi 0, %s293
      %s295 = sphi 0, %s293
      %s296 = sphi 0, %s295
      %s310 = sphi 0, %s296
      %s316 = sphi 0, %s318
      %s319 = sphi 0, %s316
      %s320 = sphi 0, %s319
      %s336 = sphi 0, %s320
    $region4: #{tpu_custom_call.1} parent=1 // loop_header_branch
      %31 = sbr.rel (%p29) target = $region8
    $region5: #{tpu_custom_call.1} parent=1 // loop_body
      %s33 = ssub.s32 %s28, 1
      %s34 = ssub.s32 %s28, 2
      %s35 = sadd.s32 %s28, 1
      %s36 = ssub.s32 %s28, %s35
      %p37 = scmp.eq.s32.totalorder %s36, 0
      %s39 = sadd.s32 %s38, 1
      %s40 = scalar_select %p37, %s38, %s39
      %p43 = pneg %p37
      %p44 = scmp.eq.s32.totalorder %s28, 1
      %p45 = por %p43, %p44
      %p46 = scmp.ne.s32.totalorder %s38, %s41
      %p47 = scmp.eq.s32.totalorder %s28, 0
      %p48 = por %p46, %p47
      %p49 = scmp.ne.s32.totalorder %s38, %s41
      %p50 = scmp.eq.s32.totalorder %s33, 1
      %p51 = por %p49, %p50
      %p52 = scmp.ne.s32.totalorder %s41, %s42
      %p53 = scmp.eq.s32.totalorder %s33, 0
      %p54 = por %p52, %p53
      %p55 = scmp.ne.s32.totalorder %s41, %s42
      %p56 = scmp.eq.s32.totalorder %s34, 1
      %p57 = por %p55, %p56
      %p59 = scmp.ne.s32.totalorder %s42, %s58
      %p60 = scmp.eq.s32.totalorder %s34, 0
      %p61 = por %p59, %p60
      %s63 = sadd.s32 %s62, 1
      %p66 = scmp.eq.s32.totalorder %s28, 1
      %p67 = scmp.ne.s32.totalorder %s62, %s64
      %p68 = scmp.eq.s32.totalorder %s28, 0
      %p69 = por %p67, %p68
      %p70 = scmp.ne.s32.totalorder %s62, %s64
      %p71 = scmp.eq.s32.totalorder %s33, 1
      %p72 = por %p70, %p71
      %p73 = scmp.ne.s32.totalorder %s64, %s65
      %p74 = scmp.eq.s32.totalorder %s33, 0
      %p75 = por %p73, %p74
      %p76 = scmp.ne.s32.totalorder %s64, %s65
      %p77 = scmp.eq.s32.totalorder %s34, 1
      %p78 = por %p76, %p77
      %p80 = scmp.ne.s32.totalorder %s65, %s79
      %p81 = scmp.eq.s32.totalorder %s34, 0
      %p82 = por %p80, %p81
      %s84 = sadd.s32 %s83, 1
      %p87 = scmp.eq.s32.totalorder %s28, 1
      %p88 = scmp.ne.s32.totalorder %s83, %s85
      %p89 = scmp.eq.s32.totalorder %s28, 0
      %p90 = por %p88, %p89
      %p91 = scmp.ne.s32.totalorder %s83, %s85
      %p92 = scmp.eq.s32.totalorder %s33, 1
      %p93 = por %p91, %p92
      %p94 = scmp.ne.s32.totalorder %s85, %s86
      %p95 = scmp.eq.s32.totalorder %s33, 0
      %p96 = por %p94, %p95
      %p97 = scmp.ne.s32.totalorder %s85, %s86
      %p98 = scmp.eq.s32.totalorder %s34, 1
      %p99 = por %p97, %p98
      %p101 = scmp.ne.s32.totalorder %s86, %s100
      %p102 = scmp.eq.s32.totalorder %s34, 0
      %p103 = por %p101, %p102
      %s105 = sadd.s32 %s104, 1
      %p108 = scmp.eq.s32.totalorder %s28, 1
      %p109 = scmp.ne.s32.totalorder %s104, %s106
      %p110 = scmp.eq.s32.totalorder %s28, 0
      %p111 = por %p109, %p110
      %p112 = scmp.ne.s32.totalorder %s104, %s106
      %p113 = scmp.eq.s32.totalorder %s33, 1
      %p114 = por %p112, %p113
      %p115 = scmp.ne.s32.totalorder %s106, %s107
      %p116 = scmp.eq.s32.totalorder %s33, 0
      %p117 = por %p115, %p116
      %p118 = scmp.ne.s32.totalorder %s106, %s107
      %p119 = scmp.eq.s32.totalorder %s34, 1
      %p120 = por %p118, %p119
      %p122 = scmp.ne.s32.totalorder %s107, %s121
      %p123 = scmp.eq.s32.totalorder %s34, 0
      %p124 = por %p122, %p123
      %s126 = sadd.s32 %s125, 1
      %p129 = scmp.eq.s32.totalorder %s28, 1
      %p130 = scmp.ne.s32.totalorder %s125, %s127
      %p131 = scmp.eq.s32.totalorder %s28, 0
      %p132 = por %p130, %p131
      %p133 = scmp.ne.s32.totalorder %s125, %s127
      %p134 = scmp.eq.s32.totalorder %s33, 1
      %p135 = por %p133, %p134
      %p136 = scmp.ne.s32.totalorder %s127, %s128
      %p137 = scmp.eq.s32.totalorder %s33, 0
      %p138 = por %p136, %p137
      %p139 = scmp.ne.s32.totalorder %s127, %s128
      %p140 = scmp.eq.s32.totalorder %s34, 1
      %p141 = por %p139, %p140
      %p143 = scmp.ne.s32.totalorder %s128, %s142
      %p144 = scmp.eq.s32.totalorder %s34, 0
      %p145 = por %p143, %p144
      %s147 = sadd.s32 %s146, 1
      %p150 = scmp.eq.s32.totalorder %s28, 1
      %p151 = scmp.ne.s32.totalorder %s146, %s148
      %p152 = scmp.eq.s32.totalorder %s28, 0
      %p153 = por %p151, %p152
      %p154 = scmp.ne.s32.totalorder %s146, %s148
      %p155 = scmp.eq.s32.totalorder %s33, 1
      %p156 = por %p154, %p155
      %p157 = scmp.ne.s32.totalorder %s148, %s149
      %p158 = scmp.eq.s32.totalorder %s33, 0
      %p159 = por %p157, %p158
      %p160 = scmp.ne.s32.totalorder %s148, %s149
      %p161 = scmp.eq.s32.totalorder %s34, 1
      %p162 = por %p160, %p161
      %p164 = scmp.ne.s32.totalorder %s149, %s163
      %p165 = scmp.eq.s32.totalorder %s34, 0
      %p166 = por %p164, %p165
      %s168 = sadd.s32 %s167, 1
      %p171 = scmp.eq.s32.totalorder %s28, 1
      %p172 = scmp.ne.s32.totalorder %s167, %s169
      %p173 = scmp.eq.s32.totalorder %s28, 0
      %p174 = por %p172, %p173
      %p175 = scmp.ne.s32.totalorder %s167, %s169
      %p176 = scmp.eq.s32.totalorder %s33, 1
      %p177 = por %p175, %p176
      %p178 = scmp.ne.s32.totalorder %s169, %s170
      %p179 = scmp.eq.s32.totalorder %s33, 0
      %p180 = por %p178, %p179
      %p181 = scmp.ne.s32.totalorder %s169, %s170
      %p182 = scmp.eq.s32.totalorder %s34, 1
      %p183 = por %p181, %p182
      %p185 = scmp.ne.s32.totalorder %s170, %s184
      %p186 = scmp.eq.s32.totalorder %s34, 0
      %p187 = por %p185, %p186
      %s189 = sadd.s32 %s188, 1
      %p192 = scmp.eq.s32.totalorder %s28, 1
      %p193 = scmp.ne.s32.totalorder %s188, %s190
      %p194 = scmp.eq.s32.totalorder %s28, 0
      %p195 = por %p193, %p194
      %p196 = scmp.ne.s32.totalorder %s188, %s190
      %p197 = scmp.eq.s32.totalorder %s33, 1
      %p198 = por %p196, %p197
      %p199 = scmp.ne.s32.totalorder %s190, %s191
      %p200 = scmp.eq.s32.totalorder %s33, 0
      %p201 = por %p199, %p200
      %p202 = scmp.ne.s32.totalorder %s190, %s191
      %p203 = scmp.eq.s32.totalorder %s34, 1
      %p204 = por %p202, %p203
      %p206 = scmp.ne.s32.totalorder %s191, %s205
      %p207 = scmp.eq.s32.totalorder %s34, 0
      %p208 = por %p206, %p207
      %s210 = sadd.s32 %s209, 1
      %p213 = scmp.eq.s32.totalorder %s28, 1
      %p214 = scmp.ne.s32.totalorder %s209, %s211
      %p215 = scmp.eq.s32.totalorder %s28, 0
      %p216 = por %p214, %p215
      %p217 = scmp.ne.s32.totalorder %s209, %s211
      %p218 = scmp.eq.s32.totalorder %s33, 1
      %p219 = por %p217, %p218
      %p220 = scmp.ne.s32.totalorder %s211, %s212
      %p221 = scmp.eq.s32.totalorder %s33, 0
      %p222 = por %p220, %p221
      %p223 = scmp.ne.s32.totalorder %s211, %s212
      %p224 = scmp.eq.s32.totalorder %s34, 1
      %p225 = por %p223, %p224
      %p227 = scmp.ne.s32.totalorder %s212, %s226
      %p228 = scmp.eq.s32.totalorder %s34, 0
      %p229 = por %p227, %p228
      %s231 = sadd.s32 %s230, 1
      %p234 = scmp.eq.s32.totalorder %s28, 1
      %p235 = scmp.ne.s32.totalorder %s230, %s232
      %p236 = scmp.eq.s32.totalorder %s28, 0
      %p237 = por %p235, %p236
      %p238 = scmp.ne.s32.totalorder %s230, %s232
      %p239 = scmp.eq.s32.totalorder %s33, 1
      %p240 = por %p238, %p239
      %p241 = scmp.ne.s32.totalorder %s232, %s233
      %p242 = scmp.eq.s32.totalorder %s33, 0
      %p243 = por %p241, %p242
      %p244 = scmp.ne.s32.totalorder %s232, %s233
      %p245 = scmp.eq.s32.totalorder %s34, 1
      %p246 = por %p244, %p245
      %p248 = scmp.ne.s32.totalorder %s233, %s247
      %p249 = scmp.eq.s32.totalorder %s34, 0
      %p250 = por %p248, %p249
      %s252 = sadd.s32 %s251, 1
      %p255 = scmp.eq.s32.totalorder %s28, 1
      %p256 = scmp.ne.s32.totalorder %s251, %s253
      %p257 = scmp.eq.s32.totalorder %s28, 0
      %p258 = por %p256, %p257
      %p259 = scmp.ne.s32.totalorder %s251, %s253
      %p260 = scmp.eq.s32.totalorder %s33, 1
      %p261 = por %p259, %p260
      %p262 = scmp.ne.s32.totalorder %s253, %s254
      %p263 = scmp.eq.s32.totalorder %s33, 0
      %p264 = por %p262, %p263
      %p265 = scmp.ne.s32.totalorder %s253, %s254
      %p266 = scmp.eq.s32.totalorder %s34, 1
      %p267 = por %p265, %p266
      %p269 = scmp.ne.s32.totalorder %s254, %s268
      %p270 = scmp.eq.s32.totalorder %s34, 0
      %p271 = por %p269, %p270
      %s273 = sadd.s32 %s272, 1
      %p276 = scmp.eq.s32.totalorder %s28, 1
      %p277 = scmp.ne.s32.totalorder %s272, %s274
      %p278 = scmp.eq.s32.totalorder %s28, 0
      %p279 = por %p277, %p278
      %p280 = scmp.ne.s32.totalorder %s272, %s274
      %p281 = scmp.eq.s32.totalorder %s33, 1
      %p282 = por %p280, %p281
      %p283 = scmp.ne.s32.totalorder %s274, %s275
      %p284 = scmp.eq.s32.totalorder %s33, 0
      %p285 = por %p283, %p284
      %p286 = scmp.ne.s32.totalorder %s274, %s275
      %p287 = scmp.eq.s32.totalorder %s34, 1
      %p288 = por %p286, %p287
      %p290 = scmp.ne.s32.totalorder %s275, %s289
      %p291 = scmp.eq.s32.totalorder %s34, 0
      %p292 = por %p290, %p291
      %s294 = sadd.s32 %s293, 1
      %p297 = scmp.eq.s32.totalorder %s28, 1
      %p298 = scmp.ne.s32.totalorder %s293, %s295
      %p299 = scmp.eq.s32.totalorder %s28, 0
      %p300 = por %p298, %p299
      %p301 = scmp.ne.s32.totalorder %s293, %s295
      %p302 = scmp.eq.s32.totalorder %s33, 1
      %p303 = por %p301, %p302
      %p304 = scmp.ne.s32.totalorder %s295, %s296
      %p305 = scmp.eq.s32.totalorder %s33, 0
      %p306 = por %p304, %p305
      %p307 = scmp.ne.s32.totalorder %s295, %s296
      %p308 = scmp.eq.s32.totalorder %s34, 1
      %p309 = por %p307, %p308
      %p311 = scmp.ne.s32.totalorder %s296, %s310
      %p312 = scmp.eq.s32.totalorder %s34, 0
      %p313 = por %p311, %p312
      %s314 = ssub.s32 %s28, %s35
      %p315 = scmp.eq.s32.totalorder %s314, 0
      %s317 = sadd.s32 %s316, 1
      %s318 = scalar_select %p315, %s316, %s317
      %p321 = pneg %p315
      %p322 = scmp.eq.s32.totalorder %s28, 1
      %p323 = por %p321, %p322
      %p324 = scmp.ne.s32.totalorder %s316, %s319
      %p325 = scmp.eq.s32.totalorder %s28, 0
      %p326 = por %p324, %p325
      %p327 = scmp.ne.s32.totalorder %s316, %s319
      %p328 = scmp.eq.s32.totalorder %s33, 1
      %p329 = por %p327, %p328
      %p330 = scmp.ne.s32.totalorder %s319, %s320
      %p331 = scmp.eq.s32.totalorder %s33, 0
      %p332 = por %p330, %p331
      %p333 = scmp.ne.s32.totalorder %s319, %s320
      %p334 = scmp.eq.s32.totalorder %s34, 1
      %p335 = por %p333, %p334
      %p337 = scmp.ne.s32.totalorder %s320, %s336
      %p338 = scmp.eq.s32.totalorder %s34, 0
      %p339 = por %p337, %p338
      %p340 = scmp.le.s32.totalorder 1, %s28
      %p341 = scmp.lt.s32.totalorder %s28, 3
      %p342 = pnand %p340, %p341
      %p343 = pneg %p342
      // Predicated region
      $region9: #{tpu_custom_call.1} parent=5 // pred_check
        _
      $region10: #{tpu_custom_call.1} parent=5 // pred_check_branch
        %345 = sbr.rel (%p342) target = $region12
      $region11: #{tpu_custom_call.1} parent=5 // pred_region
        %s346 = ssub.s32 %s28, 1
        // Predicated region
        $region13: #{tpu_custom_call.1} parent=11 // pred_check
          %p347 = pneg %p75
        $region14: #{tpu_custom_call.1} parent=11 // pred_check_branch
          %349 = sbr.rel (%p347) target = $region16
        $region15: #{tpu_custom_call.1} parent=11 // pred_region
          %s351 = ssub.s32 3072, 3072
          %352 = vsyncadd [#allocation6], %s351
          %s353 = sshll.u32 [#allocation5], 4
          %s354 = int_to_ptr.vmem [resolvable:$true] %s353
          %359 = dma.hbm_to_vmem [thread:$0]  %s1, 3072, %s354, [#allocation6], 64, 64, 4
        $region16: #{tpu_custom_call.1} parent=11 // pred_fallthru
          _
        // Predicated region
        $region17: #{tpu_custom_call.1} parent=11 // pred_check
          %p360 = pneg %p96
        $region18: #{tpu_custom_call.1} parent=11 // pred_check_branch
          %362 = sbr.rel (%p360) target = $region20
        $region19: #{tpu_custom_call.1} parent=11 // pred_region
          _
        $region20: #{tpu_custom_call.1} parent=11 // pred_fallthru
          _
        // Predicated region
        $region21: #{tpu_custom_call.1} parent=11 // pred_check
          %p363 = pneg %p117
        $region22: #{tpu_custom_call.1} parent=11 // pred_check_branch
          %365 = sbr.rel (%p363) target = $region24
        $region23: #{tpu_custom_call.1} parent=11 // pred_region
          %s367 = ssub.s32 3072, 3072
          %368 = vsyncadd [#allocation6], %s367
          %s369 = sshll.u32 [#allocation7], 4
          %s370 = int_to_ptr.vmem [resolvable:$true] %s369
          %375 = dma.hbm_to_vmem [thread:$0]  %s3, 3072, %s370, [#allocation6], 64, 64, 4
        $region24: #{tpu_custom_call.1} parent=11 // pred_fallthru
          _
        // Predicated region
        $region25: #{tpu_custom_call.1} parent=11 // pred_check
          %p376 = pneg %p138
        $region26: #{tpu_custom_call.1} parent=11 // pred_check_branch
          %378 = sbr.rel (%p376) target = $region28
        $region27: #{tpu_custom_call.1} parent=11 // pred_region
          _
        $region28: #{tpu_custom_call.1} parent=11 // pred_fallthru
          _
        // Predicated region
        $region29: #{tpu_custom_call.1} parent=11 // pred_check
          %p379 = pneg %p159
        $region30: #{tpu_custom_call.1} parent=11 // pred_check_branch
          %381 = sbr.rel (%p379) target = $region32
        $region31: #{tpu_custom_call.1} parent=11 // pred_region
          %s383 = ssub.s32 3072, 3072
          %384 = vsyncadd [#allocation9], %s383
          %s385 = sshll.u32 [#allocation8], 4
          %s386 = int_to_ptr.vmem [resolvable:$true] %s385
          %391 = dma.hbm_to_vmem [thread:$0]  %s5, 3072, %s386, [#allocation9], 64, 64, 4
        $region32: #{tpu_custom_call.1} parent=11 // pred_fallthru
          _
        // Predicated region
        $region33: #{tpu_custom_call.1} parent=11 // pred_check
          %p392 = pneg %p180
        $region34: #{tpu_custom_call.1} parent=11 // pred_check_branch
          %394 = sbr.rel (%p392) target = $region36
        $region35: #{tpu_custom_call.1} parent=11 // pred_region
          _
        $region36: #{tpu_custom_call.1} parent=11 // pred_fallthru
          _
        // Predicated region
        $region37: #{tpu_custom_call.1} parent=11 // pred_check
          %p395 = pneg %p201
        $region38: #{tpu_custom_call.1} parent=11 // pred_check_branch
          %397 = sbr.rel (%p395) target = $region40
        $region39: #{tpu_custom_call.1} parent=11 // pred_region
          %s399 = ssub.s32 3072, 3072
          %400 = vsyncadd [#allocation9], %s399
          %s401 = sshll.u32 [#allocation10], 4
          %s402 = int_to_ptr.vmem [resolvable:$true] %s401
          %407 = dma.hbm_to_vmem [thread:$0]  %s7, 3072, %s402, [#allocation9], 64, 64, 4
        $region40: #{tpu_custom_call.1} parent=11 // pred_fallthru
          _
        // Predicated region
        $region41: #{tpu_custom_call.1} parent=11 // pred_check
          %p408 = pneg %p222
        $region42: #{tpu_custom_call.1} parent=11 // pred_check_branch
          %410 = sbr.rel (%p408) target = $region44
        $region43: #{tpu_custom_call.1} parent=11 // pred_region
          _
        $region44: #{tpu_custom_call.1} parent=11 // pred_fallthru
          _
        // Predicated region
        $region45: #{tpu_custom_call.1} parent=11 // pred_check
          %p411 = pneg %p243
        $region46: #{tpu_custom_call.1} parent=11 // pred_check_branch
          %413 = sbr.rel (%p411) target = $region48
        $region47: #{tpu_custom_call.1} parent=11 // pred_region
          %s415 = ssub.s32 6144, 6144
          %416 = vsyncadd [#allocation12], %s415
          %s417 = sshll.u32 [#allocation11], 4
          %s418 = int_to_ptr.vmem [resolvable:$true] %s417
          %423 = dma.hbm_to_vmem [thread:$0]  %s9, 6144, %s418, [#allocation12], 128, 128, 8
        $region48: #{tpu_custom_call.1} parent=11 // pred_fallthru
          _
        // Predicated region
        $region49: #{tpu_custom_call.1} parent=11 // pred_check
          %p424 = pneg %p264
        $region50: #{tpu_custom_call.1} parent=11 // pred_check_branch
          %426 = sbr.rel (%p424) target = $region52
        $region51: #{tpu_custom_call.1} parent=11 // pred_region
          _
        $region52: #{tpu_custom_call.1} parent=11 // pred_fallthru
          _
        // Predicated region
        $region53: #{tpu_custom_call.1} parent=11 // pred_check
          %p427 = pneg %p285
        $region54: #{tpu_custom_call.1} parent=11 // pred_check_branch
          %429 = sbr.rel (%p427) target = $region56
        $region55: #{tpu_custom_call.1} parent=11 // pred_region
          %s431 = ssub.s32 3072, 3072
          %432 = vsyncadd [#allocation12], %s431
          %s433 = sshll.u32 [#allocation13], 4
          %s434 = int_to_ptr.vmem [resolvable:$true] %s433
          %439 = dma.hbm_to_vmem [thread:$0]  %s11, 3072, %s434, [#allocation12], 64, 64, 4
        $region56: #{tpu_custom_call.1} parent=11 // pred_fallthru
          _
        // Predicated region
        $region57: #{tpu_custom_call.1} parent=11 // pred_check
          %p440 = pneg %p306
        $region58: #{tpu_custom_call.1} parent=11 // pred_check_branch
          %442 = sbr.rel (%p440) target = $region60
        $region59: #{tpu_custom_call.1} parent=11 // pred_region
          _
        $region60: #{tpu_custom_call.1} parent=11 // pred_fallthru
          _
      $region12: #{tpu_custom_call.1} parent=5 // pred_fallthru
        _
      %p443 = scmp.lt.s32.totalorder %s28, 2
      // Predicated region
      $region61: #{tpu_custom_call.1} parent=5 // pred_check
        %p444 = pneg %p443
      $region62: #{tpu_custom_call.1} parent=5 // pred_check_branch
        %446 = sbr.rel (%p444) target = $region64
      $region63: #{tpu_custom_call.1} parent=5 // pred_region
        // Predicated region
        $region65: #{tpu_custom_call.1} parent=63 // pred_check
          %p447 = pneg %p48
        $region66: #{tpu_custom_call.1} parent=63 // pred_check_branch
          %449 = sbr.rel (%p447) target = $region68
        $region67: #{tpu_custom_call.1} parent=63 // pred_region
          %s450 = sand.u32 %s38, 1
          %s451 = scalar_lea.sflag [#allocation3], %s450
          %s452 = sand.u32 %s38, 1
          %s453 = smul.addr %s452, 16
          %s454 = scalar_lea.vmem [#allocation2], %s453
          %s456 = ssub.s32 256, 256
          %457 = vsyncadd %s451, %s456
          %s458 = smul.addr %s28, 2
          %s459 = smul.addr %s458, 128
          %s460 = scalar_lea.hbm %s0, %s459
          %s461 = sshll.u32 %s454, 4
          %s462 = int_to_ptr.vmem [resolvable:$true] %s461
          %467 = dma.hbm_to_vmem [thread:$0]  %s460, 256, %s462, %s451, 128, 128, 8
        $region68: #{tpu_custom_call.1} parent=63 // pred_fallthru
          _
      $region64: #{tpu_custom_call.1} parent=5 // pred_fallthru
        _
      %p468 = scmp.le.s32.totalorder 1, %s28
      %p469 = scmp.lt.s32.totalorder %s28, 3
      %p470 = pnand %p468, %p469
      %p471 = pneg %p470
      // Predicated region
      $region69: #{tpu_custom_call.1} parent=5 // pred_check
        _
      $region70: #{tpu_custom_call.1} parent=5 // pred_check_branch
        %473 = sbr.rel (%p470) target = $region72
      $region71: #{tpu_custom_call.1} parent=5 // pred_region
        %s474 = ssub.s32 %s28, 1
        %s475 = sand.u32 %s41, 1
        %s476 = scalar_lea.sflag [#allocation3], %s475
        %s477 = sand.u32 %s41, 1
        %s478 = smul.addr %s477, 16
        %s479 = scalar_lea.vmem [#allocation2], %s478
        // Predicated region
        $region73: #{tpu_custom_call.1} parent=71 // pred_check
          %p480 = pneg %p54
        $region74: #{tpu_custom_call.1} parent=71 // pred_check_branch
          %482 = sbr.rel (%p480) target = $region76
        $region75: #{tpu_custom_call.1} parent=71 // pred_region
          %483 = dma.done %s476, 256
        $region76: #{tpu_custom_call.1} parent=71 // pred_fallthru
          _
        // Predicated region
        $region77: #{tpu_custom_call.1} parent=71 // pred_check
          %p484 = pneg %p75
        $region78: #{tpu_custom_call.1} parent=71 // pred_check_branch
          %486 = sbr.rel (%p484) target = $region80
        $region79: #{tpu_custom_call.1} parent=71 // pred_region
          %487 = dma.done [#allocation6], 3072
        $region80: #{tpu_custom_call.1} parent=71 // pred_fallthru
          _
        // Predicated region
        $region81: #{tpu_custom_call.1} parent=71 // pred_check
          %p488 = pneg %p117
        $region82: #{tpu_custom_call.1} parent=71 // pred_check_branch
          %490 = sbr.rel (%p488) target = $region84
        $region83: #{tpu_custom_call.1} parent=71 // pred_region
          %491 = dma.done [#allocation6], 3072
        $region84: #{tpu_custom_call.1} parent=71 // pred_fallthru
          _
        // Predicated region
        $region85: #{tpu_custom_call.1} parent=71 // pred_check
          %p492 = pneg %p159
        $region86: #{tpu_custom_call.1} parent=71 // pred_check_branch
          %494 = sbr.rel (%p492) target = $region88
        $region87: #{tpu_custom_call.1} parent=71 // pred_region
          %495 = dma.done [#allocation9], 3072
        $region88: #{tpu_custom_call.1} parent=71 // pred_fallthru
          _
        // Predicated region
        $region89: #{tpu_custom_call.1} parent=71 // pred_check
          %p496 = pneg %p201
        $region90: #{tpu_custom_call.1} parent=71 // pred_check_branch
          %498 = sbr.rel (%p496) target = $region92
        $region91: #{tpu_custom_call.1} parent=71 // pred_region
          %499 = dma.done [#allocation9], 3072
        $region92: #{tpu_custom_call.1} parent=71 // pred_fallthru
          _
        // Predicated region
        $region93: #{tpu_custom_call.1} parent=71 // pred_check
          %p500 = pneg %p243
        $region94: #{tpu_custom_call.1} parent=71 // pred_check_branch
          %502 = sbr.rel (%p500) target = $region96
        $region95: #{tpu_custom_call.1} parent=71 // pred_region
          %503 = dma.done [#allocation12], 6144
        $region96: #{tpu_custom_call.1} parent=71 // pred_fallthru
          _
        // Predicated region
        $region97: #{tpu_custom_call.1} parent=71 // pred_check
          %p504 = pneg %p285
        $region98: #{tpu_custom_call.1} parent=71 // pred_check_branch
          %506 = sbr.rel (%p504) target = $region100
        $region99: #{tpu_custom_call.1} parent=71 // pred_region
          %507 = dma.done [#allocation12], 3072
        $region100: #{tpu_custom_call.1} parent=71 // pred_fallthru
          _
        %s508 = sand.u32 %s41, 1
        %s509 = scalar_lea.sflag [#allocation3], %s508
        %s510 = sand.u32 %s41, 1
        %s511 = smul.addr %s510, 16
        %s512 = scalar_lea.vmem [#allocation2], %s511
        %p513 = pneg %p54
        %p514 = pneg %p51
        %p515 = pneg %p75
        %p516 = pneg %p72
        %p517 = pneg %p96
        %p518 = pneg %p93
        %p519 = pneg %p117
        %p520 = pneg %p114
        %p521 = pneg %p138
        %p522 = pneg %p135
        %p523 = pneg %p159
        %p524 = pneg %p156
        %p525 = pneg %p180
        %p526 = pneg %p177
        %p527 = pneg %p201
        %p528 = pneg %p198
        %p529 = pneg %p222
        %p530 = pneg %p219
        %p531 = pneg %p243
        %p532 = pneg %p240
        %p533 = pneg %p264
        %p534 = pneg %p261
        %p535 = pneg %p285
        %p536 = pneg %p282
        %p537 = pneg %p306
        %p538 = pneg %p303
        %p539 = pneg %p332
        %p540 = pneg %p329
        %s541 = sand.u32 %s319, 1
        %s542 = scalar_lea.sflag [#allocation4], %s541
        %s543 = sand.u32 %s319, 1
        %s544 = scalar_lea.vmem [#allocation14], %s543
        %v546 = vld [vmem:[%s479] sm:$0xff]
        %v547 = vld [vmem:[%s479 + $0x8] sm:$0xff]
        %v548 = vld [vmem:[#allocation5] sm:$0xf]
        %v549 = vld [vmem:[#allocation5 + $0x4] sm:$0xf]
        %v550 = vld [vmem:[#allocation5 + $0x8] sm:$0xf]
        %v551 = vld [vmem:[#allocation5 + $0xc] sm:$0xf]
        %v552 = vld [vmem:[#allocation5 + $0x10] sm:$0xf]
        %v553 = vld [vmem:[#allocation5 + $0x14] sm:$0xf]
        %v554 = vld [vmem:[#allocation5 + $0x18] sm:$0xf]
        %v555 = vld [vmem:[#allocation5 + $0x1c] sm:$0xf]
        %v556 = vld [vmem:[#allocation5 + $0x20] sm:$0xf]
        %v557 = vld [vmem:[#allocation5 + $0x24] sm:$0xf]
        %v558 = vld [vmem:[#allocation5 + $0x28] sm:$0xf]
        %v559 = vld [vmem:[#allocation5 + $0x2c] sm:$0xf]
        %v560 = vld [vmem:[#allocation5 + $0x30] sm:$0xf]
        %v561 = vld [vmem:[#allocation5 + $0x34] sm:$0xf]
        %v562 = vld [vmem:[#allocation5 + $0x38] sm:$0xf]
        %v563 = vld [vmem:[#allocation5 + $0x3c] sm:$0xf]
        %v564 = vld [vmem:[#allocation5 + $0x40] sm:$0xf]
        %v565 = vld [vmem:[#allocation5 + $0x44] sm:$0xf]
        %v566 = vld [vmem:[#allocation5 + $0x48] sm:$0xf]
        %v567 = vld [vmem:[#allocation5 + $0x4c] sm:$0xf]
        %v568 = vld [vmem:[#allocation5 + $0x50] sm:$0xf]
        %v569 = vld [vmem:[#allocation5 + $0x54] sm:$0xf]
        %v570 = vld [vmem:[#allocation5 + $0x58] sm:$0xf]
        %v571 = vld [vmem:[#allocation5 + $0x5c] sm:$0xf]
        %v572 = vld [vmem:[#allocation5 + $0x60] sm:$0xf]
        %v573 = vld [vmem:[#allocation5 + $0x64] sm:$0xf]
        %v574 = vld [vmem:[#allocation5 + $0x68] sm:$0xf]
        %v575 = vld [vmem:[#allocation5 + $0x6c] sm:$0xf]
        %v576 = vld [vmem:[#allocation5 + $0x70] sm:$0xf]
        %v577 = vld [vmem:[#allocation5 + $0x74] sm:$0xf]
        %v578 = vld [vmem:[#allocation5 + $0x78] sm:$0xf]
        %v579 = vld [vmem:[#allocation5 + $0x7c] sm:$0xf]
        %v580 = vld [vmem:[#allocation5 + $0x80] sm:$0xf]
        %v581 = vld [vmem:[#allocation5 + $0x84] sm:$0xf]
        %v582 = vld [vmem:[#allocation5 + $0x88] sm:$0xf]
        %v583 = vld [vmem:[#allocation5 + $0x8c] sm:$0xf]
        %v584 = vld [vmem:[#allocation5 + $0x90] sm:$0xf]
        %v585 = vld [vmem:[#allocation5 + $0x94] sm:$0xf]
        %v586 = vld [vmem:[#allocation5 + $0x98] sm:$0xf]
        %v587 = vld [vmem:[#allocation5 + $0x9c] sm:$0xf]
        %v588 = vld [vmem:[#allocation5 + $0xa0] sm:$0xf]
        %v589 = vld [vmem:[#allocation5 + $0xa4] sm:$0xf]
        %v590 = vld [vmem:[#allocation5 + $0xa8] sm:$0xf]
        %v591 = vld [vmem:[#allocation5 + $0xac] sm:$0xf]
        %v592 = vld [vmem:[#allocation5 + $0xb0] sm:$0xf]
        %v593 = vld [vmem:[#allocation5 + $0xb4] sm:$0xf]
        %v594 = vld [vmem:[#allocation5 + $0xb8] sm:$0xf]
        %v595 = vld [vmem:[#allocation5 + $0xbc] sm:$0xf]
        %v596 = vld [vmem:[%s2] sm:$0x1]
        %v597 = vld [vmem:[#allocation7] sm:$0xf]
        %v598 = vld [vmem:[#allocation7 + $0x4] sm:$0xf]
        %v599 = vld [vmem:[#allocation7 + $0x8] sm:$0xf]
        %v600 = vld [vmem:[#allocation7 + $0xc] sm:$0xf]
        %v601 = vld [vmem:[#allocation7 + $0x10] sm:$0xf]
        %v602 = vld [vmem:[#allocation7 + $0x14] sm:$0xf]
        %v603 = vld [vmem:[#allocation7 + $0x18] sm:$0xf]
        %v604 = vld [vmem:[#allocation7 + $0x1c] sm:$0xf]
        %v605 = vld [vmem:[#allocation7 + $0x20] sm:$0xf]
        %v606 = vld [vmem:[#allocation7 + $0x24] sm:$0xf]
        %v607 = vld [vmem:[#allocation7 + $0x28] sm:$0xf]
        %v608 = vld [vmem:[#allocation7 + $0x2c] sm:$0xf]
        %v609 = vld [vmem:[#allocation7 + $0x30] sm:$0xf]
        %v610 = vld [vmem:[#allocation7 + $0x34] sm:$0xf]
        %v611 = vld [vmem:[#allocation7 + $0x38] sm:$0xf]
        %v612 = vld [vmem:[#allocation7 + $0x3c] sm:$0xf]
        %v613 = vld [vmem:[#allocation7 + $0x40] sm:$0xf]
        %v614 = vld [vmem:[#allocation7 + $0x44] sm:$0xf]
        %v615 = vld [vmem:[#allocation7 + $0x48] sm:$0xf]
        %v616 = vld [vmem:[#allocation7 + $0x4c] sm:$0xf]
        %v617 = vld [vmem:[#allocation7 + $0x50] sm:$0xf]
        %v618 = vld [vmem:[#allocation7 + $0x54] sm:$0xf]
        %v619 = vld [vmem:[#allocation7 + $0x58] sm:$0xf]
        %v620 = vld [vmem:[#allocation7 + $0x5c] sm:$0xf]
        %v621 = vld [vmem:[#allocation7 + $0x60] sm:$0xf]
        %v622 = vld [vmem:[#allocation7 + $0x64] sm:$0xf]
        %v623 = vld [vmem:[#allocation7 + $0x68] sm:$0xf]
        %v624 = vld [vmem:[#allocation7 + $0x6c] sm:$0xf]
        %v625 = vld [vmem:[#allocation7 + $0x70] sm:$0xf]
        %v626 = vld [vmem:[#allocation7 + $0x74] sm:$0xf]
        %v627 = vld [vmem:[#allocation7 + $0x78] sm:$0xf]
        %v628 = vld [vmem:[#allocation7 + $0x7c] sm:$0xf]
        %v629 = vld [vmem:[#allocation7 + $0x80] sm:$0xf]
        %v630 = vld [vmem:[#allocation7 + $0x84] sm:$0xf]
        %v631 = vld [vmem:[#allocation7 + $0x88] sm:$0xf]
        %v632 = vld [vmem:[#allocation7 + $0x8c] sm:$0xf]
        %v633 = vld [vmem:[#allocation7 + $0x90] sm:$0xf]
        %v634 = vld [vmem:[#allocation7 + $0x94] sm:$0xf]
        %v635 = vld [vmem:[#allocation7 + $0x98] sm:$0xf]
        %v636 = vld [vmem:[#allocation7 + $0x9c] sm:$0xf]
        %v637 = vld [vmem:[#allocation7 + $0xa0] sm:$0xf]
        %v638 = vld [vmem:[#allocation7 + $0xa4] sm:$0xf]
        %v639 = vld [vmem:[#allocation7 + $0xa8] sm:$0xf]
        %v640 = vld [vmem:[#allocation7 + $0xac] sm:$0xf]
        %v641 = vld [vmem:[#allocation7 + $0xb0] sm:$0xf]
        %v642 = vld [vmem:[#allocation7 + $0xb4] sm:$0xf]
        %v643 = vld [vmem:[#allocation7 + $0xb8] sm:$0xf]
        %v644 = vld [vmem:[#allocation7 + $0xbc] sm:$0xf]
        %v645 = vld [vmem:[%s4] sm:$0x1]
        %v646 = vpack.c.bf16 %v547, %v546
        %v648 = vrot.slane %v646, 7
        %vm649 = vcmask 1040384
        %v652 = vsel %vm649, 0, %v648
        %vm654 = vsmask.f32 7424
        %v655 = vshrl.u32 %v652, 16
        %v657 = vshll.u32 %v652, 16
        %v659 = vrot.slane %v657, 1
        %v660 = vor.u32 %v655, %v659
        %v661 = vshll.u32 %v648, 16
        %v663 = vrot.slane %v661, 1
        %v664 = vsel %vm654, %v660, %v663
        %vm667 = vcmask 1046528
        %v668 = vrot.slane %v652, 1
        %v669 = vrot.slane %v648, 1
        %v670 = vsel %vm667, %v668, %v669
        %v673 = vlaneseq
        %v674 = vshrl.u32 %v673, 7
        %v675 = vsub.s32 0, %v674
        %v676 = vrot.slane %v596, %v675
        %v726 = vunpack.c.l.b16 %v548
        %v727 = vunpack.c.l.b16 %v549
        %v728 = vunpack.c.l.b16 %v550
        %v729 = vunpack.c.l.b16 %v551
        %v730 = vunpack.c.l.b16 %v552
        %v731 = vunpack.c.l.b16 %v553
        %v732 = vunpack.c.l.b16 %v554
        %v733 = vunpack.c.l.b16 %v555
        %v734 = vunpack.c.l.b16 %v556
        %v735 = vunpack.c.l.b16 %v557
        %v736 = vunpack.c.l.b16 %v558
        %v737 = vunpack.c.l.b16 %v559
        %v738 = vunpack.c.l.b16 %v560
        %v739 = vunpack.c.l.b16 %v561
        %v740 = vunpack.c.l.b16 %v562
        %v741 = vunpack.c.l.b16 %v563
        %v742 = vunpack.c.l.b16 %v564
        %v743 = vunpack.c.l.b16 %v565
        %v744 = vunpack.c.l.b16 %v566
        %v745 = vunpack.c.l.b16 %v567
        %v746 = vunpack.c.l.b16 %v568
        %v747 = vunpack.c.l.b16 %v569
        %v748 = vunpack.c.l.b16 %v570
        %v749 = vunpack.c.l.b16 %v571
        %v750 = vunpack.c.l.b16 %v572
        %v751 = vunpack.c.l.b16 %v573
        %v752 = vunpack.c.l.b16 %v574
        %v753 = vunpack.c.l.b16 %v575
        %v754 = vunpack.c.l.b16 %v576
        %v755 = vunpack.c.l.b16 %v577
        %v756 = vunpack.c.l.b16 %v578
        %v757 = vunpack.c.l.b16 %v579
        %v758 = vunpack.c.l.b16 %v580
        %v759 = vunpack.c.l.b16 %v581
        %v760 = vunpack.c.l.b16 %v582
        %v761 = vunpack.c.l.b16 %v583
        %v762 = vunpack.c.l.b16 %v584
        %v763 = vunpack.c.l.b16 %v585
        %v764 = vunpack.c.l.b16 %v586
        %v765 = vunpack.c.l.b16 %v587
        %v766 = vunpack.c.l.b16 %v588
        %v767 = vunpack.c.l.b16 %v589
        %v768 = vunpack.c.l.b16 %v590
        %v769 = vunpack.c.l.b16 %v591
        %v770 = vunpack.c.l.b16 %v592
        %v771 = vunpack.c.l.b16 %v593
        %v772 = vunpack.c.l.b16 %v594
        %v773 = vunpack.c.l.b16 %v595
        %v774 = vpack.c.b16 %v727, %v726
        %v775 = vpack.c.b16 %v729, %v728
        %v776 = vpack.c.b16 %v731, %v730
        %v777 = vpack.c.b16 %v733, %v732
        %v778 = vpack.c.b16 %v735, %v734
        %v779 = vpack.c.b16 %v737, %v736
        %v780 = vpack.c.b16 %v739, %v738
        %v781 = vpack.c.b16 %v741, %v740
        %v782 = vpack.c.b16 %v743, %v742
        %v783 = vpack.c.b16 %v745, %v744
        %v784 = vpack.c.b16 %v747, %v746
        %v785 = vpack.c.b16 %v749, %v748
        %v786 = vpack.c.b16 %v751, %v750
        %v787 = vpack.c.b16 %v753, %v752
        %v788 = vpack.c.b16 %v755, %v754
        %v789 = vpack.c.b16 %v757, %v756
        %v790 = vpack.c.b16 %v759, %v758
        %v791 = vpack.c.b16 %v761, %v760
        %v792 = vpack.c.b16 %v763, %v762
        %v793 = vpack.c.b16 %v765, %v764
        %v794 = vpack.c.b16 %v767, %v766
        %v795 = vpack.c.b16 %v769, %v768
        %v796 = vpack.c.b16 %v771, %v770
        %v797 = vpack.c.b16 %v773, %v772
        %822 = vmatprep.subr.bf16.mxu0 0
        %823 = vmatpush1.bf16.msra.mxu0 %v774
        %824 = vmatprep.subr.bf16.mxu0 0
        %825 = vmatpush1.bf16.msra.mxu0 %v775
        %826 = vmatprep.subr.bf16.mxu0 0
        %827 = vmatpush1.bf16.msra.mxu0 %v776
        %828 = vmatprep.subr.bf16.mxu0 0
        %829 = vmatpush1.bf16.msra.mxu0 %v777
        %830 = vmatprep.subr.bf16.mxu0 0
        %831 = vmatpush1.bf16.msra.mxu0 %v778
        %832 = vmatprep.subr.bf16.mxu0 0
        %833 = vmatpush1.bf16.msra.mxu0 %v779
        %834 = vmatprep.subr.bf16.mxu0 0
        %835 = vmatpush1.bf16.msra.mxu0 %v780
        %836 = vmatprep.subr.bf16.mxu0 0
        %837 = vmatpush1.bf16.msra.mxu0 %v781
        %838 = vmatprep.subr.bf16.mxu0 0
        %839 = vmatpush1.bf16.msra.mxu0 %v782
        %840 = vmatprep.subr.bf16.mxu0 0
        %841 = vmatpush1.bf16.msra.mxu0 %v783
        %842 = vmatprep.subr.bf16.mxu0 0
        %843 = vmatpush1.bf16.msra.mxu0 %v784
        %844 = vmatprep.subr.bf16.mxu0 0
        %845 = vmatpush1.bf16.msra.mxu0 %v785
        %846 = vmatprep.subr.bf16.mxu0 0
        %847 = vmatpush1.bf16.msra.mxu0 %v786
        %848 = vmatprep.subr.bf16.mxu0 0
        %849 = vmatpush1.bf16.msra.mxu0 %v787
        %850 = vmatprep.subr.bf16.mxu0 0
        %851 = vmatpush1.bf16.msra.mxu0 %v788
        %852 = vmatprep.subr.bf16.mxu0 0
        %853 = vmatpush1.bf16.msra.mxu0 %v789
        %854 = vmatprep.mubr.bf16.mxu0 %v664
        %855 = vmatmul.mubr.bf16.gmra.mrb[0].mxu0 %v652
        %v856 = vpop.f32.mrb[0].mxu0
        %v857 = vadd.f32 %v676, %v856
        %v858 = vpop.f32.mrb[0].mxu0
        %v859 = vpop.f32.mrb[0].mxu0
        %v860 = vadd.f32 %v676, %v859
        %v861 = vpop.f32.mrb[0].mxu0
        %862 = vdwg.mxu0
        %863 = vmatprep.subr.bf16.mxu0 0
        %864 = vmatpush1.bf16.msra.mxu0 %v790
        %865 = vmatprep.subr.bf16.mxu0 0
        %866 = vmatpush1.bf16.msra.mxu0 %v791
        %867 = vmatprep.subr.bf16.mxu0 0
        %868 = vmatpush1.bf16.msra.mxu0 %v792
        %869 = vmatprep.subr.bf16.mxu0 0
        %870 = vmatpush1.bf16.msra.mxu0 %v793
        %871 = vmatprep.subr.bf16.mxu0 0
        %872 = vmatpush1.bf16.msra.mxu0 %v794
        %873 = vmatprep.subr.bf16.mxu0 0
        %874 = vmatpush1.bf16.msra.mxu0 %v795
        %875 = vmatprep.subr.bf16.mxu0 0
        %876 = vmatpush1.bf16.msra.mxu0 %v796
        %877 = vmatprep.subr.bf16.mxu0 0
        %878 = vmatpush1.bf16.msra.mxu0 %v797
        %879 = vmatprep.subr.bf16.mxu0 0
        %880 = vmatpush1.bf16.msra.mxu0 0
        %881 = vmatprep.subr.bf16.mxu0 0
        %882 = vmatpush1.bf16.msra.mxu0 0
        %883 = vmatprep.subr.bf16.mxu0 0
        %884 = vmatpush1.bf16.msra.mxu0 0
        %885 = vmatprep.subr.bf16.mxu0 0
        %886 = vmatpush1.bf16.msra.mxu0 0
        %887 = vmatprep.subr.bf16.mxu0 0
        %888 = vmatpush1.bf16.msra.mxu0 0
        %889 = vmatprep.subr.bf16.mxu0 0
        %890 = vmatpush1.bf16.msra.mxu0 0
        %891 = vmatprep.subr.bf16.mxu0 0
        %892 = vmatpush1.bf16.msra.mxu0 0
        %893 = vmatprep.subr.bf16.mxu0 0
        %894 = vmatpush1.bf16.msra.mxu0 0
        %895 = vmatprep.mubr.bf16.mxu0 0
        %896 = vmatmul.mubr.bf16.gmra.mrb[0].mxu0 %v670
        %v897 = vpop.f32.mrb[0].mxu0
        %v898 = vadd.f32 %v857, %v897
        %v899 = vpop.f32.mrb[0].mxu0
        %v900 = vpop.f32.mrb[0].mxu0
        %v901 = vadd.f32 %v860, %v900
        %v902 = vpop.f32.mrb[0].mxu0
        %903 = vdwg.mxu0
        %v904 = vmax.f32 %v898, 0.0
        %v905 = vmax.f32 %v901, 0.0
        %v906 = vpack.c.bf16 %v905, %v904
        %v908 = vrot.slane %v906, 7
        %v910 = vsel %vm649, 0, %v908
        %v912 = vshrl.u32 %v910, 16
        %v914 = vshll.u32 %v910, 16
        %v916 = vrot.slane %v914, 1
        %v917 = vor.u32 %v912, %v916
        %v918 = vshll.u32 %v908, 16
        %v920 = vrot.slane %v918, 1
        %v921 = vsel %vm654, %v917, %v920
        %v924 = vrot.slane %v910, 1
        %v925 = vrot.slane %v908, 1
        %v926 = vsel %vm667, %v924, %v925
        %v929 = vlaneseq
        %v930 = vshrl.u32 %v929, 7
        %v931 = vsub.s32 0, %v930
        %v932 = vrot.slane %v645, %v931
        %v982 = vunpack.c.l.b16 %v597
        %v983 = vunpack.c.l.b16 %v598
        %v984 = vunpack.c.l.b16 %v599
        %v985 = vunpack.c.l.b16 %v600
        %v986 = vunpack.c.l.b16 %v601
        %v987 = vunpack.c.l.b16 %v602
        %v988 = vunpack.c.l.b16 %v603
        %v989 = vunpack.c.l.b16 %v604
        %v990 = vunpack.c.l.b16 %v605
        %v991 = vunpack.c.l.b16 %v606
        %v992 = vunpack.c.l.b16 %v607
        %v993 = vunpack.c.l.b16 %v608
        %v994 = vunpack.c.l.b16 %v609
        %v995 = vunpack.c.l.b16 %v610
        %v996 = vunpack.c.l.b16 %v611
        %v997 = vunpack.c.l.b16 %v612
        %v998 = vunpack.c.l.b16 %v613
        %v999 = vunpack.c.l.b16 %v614
        %v1000 = vunpack.c.l.b16 %v615
        %v1001 = vunpack.c.l.b16 %v616
        %v1002 = vunpack.c.l.b16 %v617
        %v1003 = vunpack.c.l.b16 %v618
        %v1004 = vunpack.c.l.b16 %v619
        %v1005 = vunpack.c.l.b16 %v620
        %v1006 = vunpack.c.l.b16 %v621
        %v1007 = vunpack.c.l.b16 %v622
        %v1008 = vunpack.c.l.b16 %v623
        %v1009 = vunpack.c.l.b16 %v624
        %v1010 = vunpack.c.l.b16 %v625
        %v1011 = vunpack.c.l.b16 %v626
        %v1012 = vunpack.c.l.b16 %v627
        %v1013 = vunpack.c.l.b16 %v628
        %v1014 = vunpack.c.l.b16 %v629
        %v1015 = vunpack.c.l.b16 %v630
        %v1016 = vunpack.c.l.b16 %v631
        %v1017 = vunpack.c.l.b16 %v632
        %v1018 = vunpack.c.l.b16 %v633
        %v1019 = vunpack.c.l.b16 %v634
        %v1020 = vunpack.c.l.b16 %v635
        %v1021 = vunpack.c.l.b16 %v636
        %v1022 = vunpack.c.l.b16 %v637
        %v1023 = vunpack.c.l.b16 %v638
        %v1024 = vunpack.c.l.b16 %v639
        %v1025 = vunpack.c.l.b16 %v640
        %v1026 = vunpack.c.l.b16 %v641
        %v1027 = vunpack.c.l.b16 %v642
        %v1028 = vunpack.c.l.b16 %v643
        %v1029 = vunpack.c.l.b16 %v644
        %v1030 = vpack.c.b16 %v983, %v982
        %v1031 = vpack.c.b16 %v985, %v984
        %v1032 = vpack.c.b16 %v987, %v986
        %v1033 = vpack.c.b16 %v989, %v988
        %v1034 = vpack.c.b16 %v991, %v990
        %v1035 = vpack.c.b16 %v993, %v992
        %v1036 = vpack.c.b16 %v995, %v994
        %v1037 = vpack.c.b16 %v997, %v996
        %v1038 = vpack.c.b16 %v999, %v998
        %v1039 = vpack.c.b16 %v1001, %v1000
        %v1040 = vpack.c.b16 %v1003, %v1002
        %v1041 = vpack.c.b16 %v1005, %v1004
        %v1042 = vpack.c.b16 %v1007, %v1006
        %v1043 = vpack.c.b16 %v1009, %v1008
        %v1044 = vpack.c.b16 %v1011, %v1010
        %v1045 = vpack.c.b16 %v1013, %v1012
        %v1046 = vpack.c.b16 %v1015, %v1014
        %v1047 = vpack.c.b16 %v1017, %v1016
        %v1048 = vpack.c.b16 %v1019, %v1018
        %v1049 = vpack.c.b16 %v1021, %v1020
        %v1050 = vpack.c.b16 %v1023, %v1022
        %v1051 = vpack.c.b16 %v1025, %v1024
        %v1052 = vpack.c.b16 %v1027, %v1026
        %v1053 = vpack.c.b16 %v1029, %v1028
        %1078 = vmatprep.subr.bf16.mxu0 0
        %1079 = vmatpush1.bf16.msra.mxu0 %v1030
        %1080 = vmatprep.subr.bf16.mxu0 0
        %1081 = vmatpush1.bf16.msra.mxu0 %v1031
        %1082 = vmatprep.subr.bf16.mxu0 0
        %1083 = vmatpush1.bf16.msra.mxu0 %v1032
        %1084 = vmatprep.subr.bf16.mxu0 0
        %1085 = vmatpush1.bf16.msra.mxu0 %v1033
        %1086 = vmatprep.subr.bf16.mxu0 0
        %1087 = vmatpush1.bf16.msra.mxu0 %v1034
        %1088 = vmatprep.subr.bf16.mxu0 0
        %1089 = vmatpush1.bf16.msra.mxu0 %v1035
        %1090 = vmatprep.subr.bf16.mxu0 0
        %1091 = vmatpush1.bf16.msra.mxu0 %v1036
        %1092 = vmatprep.subr.bf16.mxu0 0
        %1093 = vmatpush1.bf16.msra.mxu0 %v1037
        %1094 = vmatprep.subr.bf16.mxu0 0
        %1095 = vmatpush1.bf16.msra.mxu0 %v1038
        %1096 = vmatprep.subr.bf16.mxu0 0
        %1097 = vmatpush1.bf16.msra.mxu0 %v1039
        %1098 = vmatprep.subr.bf16.mxu0 0
        %1099 = vmatpush1.bf16.msra.mxu0 %v1040
        %1100 = vmatprep.subr.bf16.mxu0 0
        %1101 = vmatpush1.bf16.msra.mxu0 %v1041
        %1102 = vmatprep.subr.bf16.mxu0 0
        %1103 = vmatpush1.bf16.msra.mxu0 %v1042
        %1104 = vmatprep.subr.bf16.mxu0 0
        %1105 = vmatpush1.bf16.msra.mxu0 %v1043
        %1106 = vmatprep.subr.bf16.mxu0 0
        %1107 = vmatpush1.bf16.msra.mxu0 %v1044
        %1108 = vmatprep.subr.bf16.mxu0 0
        %1109 = vmatpush1.bf16.msra.mxu0 %v1045
        %1110 = vmatprep.mubr.bf16.mxu0 %v921
        %1111 = vmatmul.mubr.bf16.gmra.mrb[0].mxu0 %v910
        %v1112 = vpop.f32.mrb[0].mxu0
        %v1113 = vadd.f32 %v932, %v1112
        %v1114 = vpop.f32.mrb[0].mxu0
        %v1115 = vpop.f32.mrb[0].mxu0
        %v1116 = vadd.f32 %v932, %v1115
        %v1117 = vpop.f32.mrb[0].mxu0
        %1118 = vdwg.mxu0
        %1119 = vmatprep.subr.bf16.mxu0 0
        %1120 = vmatpush1.bf16.msra.mxu0 %v1046
        %1121 = vmatprep.subr.bf16.mxu0 0
        %1122 = vmatpush1.bf16.msra.mxu0 %v1047
        %1123 = vmatprep.subr.bf16.mxu0 0
        %1124 = vmatpush1.bf16.msra.mxu0 %v1048
        %1125 = vmatprep.subr.bf16.mxu0 0
        %1126 = vmatpush1.bf16.msra.mxu0 %v1049
        %1127 = vmatprep.subr.bf16.mxu0 0
        %1128 = vmatpush1.bf16.msra.mxu0 %v1050
        %1129 = vmatprep.subr.bf16.mxu0 0
        %1130 = vmatpush1.bf16.msra.mxu0 %v1051
        %1131 = vmatprep.subr.bf16.mxu0 0
        %1132 = vmatpush1.bf16.msra.mxu0 %v1052
        %1133 = vmatprep.subr.bf16.mxu0 0
        %1134 = vmatpush1.bf16.msra.mxu0 %v1053
        %1135 = vmatprep.subr.bf16.mxu0 0
        %1136 = vmatpush1.bf16.msra.mxu0 0
        %1137 = vmatprep.subr.bf16.mxu0 0
        %1138 = vmatpush1.bf16.msra.mxu0 0
        %1139 = vmatprep.subr.bf16.mxu0 0
        %1140 = vmatpush1.bf16.msra.mxu0 0
        %1141 = vmatprep.subr.bf16.mxu0 0
        %1142 = vmatpush1.bf16.msra.mxu0 0
        %1143 = vmatprep.subr.bf16.mxu0 0
        %1144 = vmatpush1.bf16.msra.mxu0 0
        %1145 = vmatprep.subr.bf16.mxu0 0
        %1146 = vmatpush1.bf16.msra.mxu0 0
        %1147 = vmatprep.subr.bf16.mxu0 0
        %1148 = vmatpush1.bf16.msra.mxu0 0
        %1149 = vmatprep.subr.bf16.mxu0 0
        %1150 = vmatpush1.bf16.msra.mxu0 0
        %1151 = vmatprep.mubr.bf16.mxu0 0
        %1152 = vmatmul.mubr.bf16.gmra.mrb[0].mxu0 %v926
        %v1153 = vpop.f32.mrb[0].mxu0
        %v1154 = vadd.f32 %v1113, %v1153
        %v1155 = vpop.f32.mrb[0].mxu0
        %v1156 = vpop.f32.mrb[0].mxu0
        %v1157 = vadd.f32 %v1116, %v1156
        %v1158 = vpop.f32.mrb[0].mxu0
        %1159 = vdwg.mxu0
        %v1160 = vmax.f32 %v1154, 0.0
        %v1161 = vmax.f32 %v1157, 0.0
        %v1162 = vadd.f32 %v1160, %v546
        %v1163 = vadd.f32 %v1161, %v547
        %v1164 = vld [vmem:[#allocation8] sm:$0xf]
        %v1165 = vld [vmem:[#allocation8 + $0x4] sm:$0xf]
        %v1166 = vld [vmem:[#allocation8 + $0x8] sm:$0xf]
        %v1167 = vld [vmem:[#allocation8 + $0xc] sm:$0xf]
        %v1168 = vld [vmem:[#allocation8 + $0x10] sm:$0xf]
        %v1169 = vld [vmem:[#allocation8 + $0x14] sm:$0xf]
        %v1170 = vld [vmem:[#allocation8 + $0x18] sm:$0xf]
        %v1171 = vld [vmem:[#allocation8 + $0x1c] sm:$0xf]
        %v1172 = vld [vmem:[#allocation8 + $0x20] sm:$0xf]
        %v1173 = vld [vmem:[#allocation8 + $0x24] sm:$0xf]
        %v1174 = vld [vmem:[#allocation8 + $0x28] sm:$0xf]
        %v1175 = vld [vmem:[#allocation8 + $0x2c] sm:$0xf]
        %v1176 = vld [vmem:[#allocation8 + $0x30] sm:$0xf]
        %v1177 = vld [vmem:[#allocation8 + $0x34] sm:$0xf]
        %v1178 = vld [vmem:[#allocation8 + $0x38] sm:$0xf]
        %v1179 = vld [vmem:[#allocation8 + $0x3c] sm:$0xf]
        %v1180 = vld [vmem:[#allocation8 + $0x40] sm:$0xf]
        %v1181 = vld [vmem:[#allocation8 + $0x44] sm:$0xf]
        %v1182 = vld [vmem:[#allocation8 + $0x48] sm:$0xf]
        %v1183 = vld [vmem:[#allocation8 + $0x4c] sm:$0xf]
        %v1184 = vld [vmem:[#allocation8 + $0x50] sm:$0xf]
        %v1185 = vld [vmem:[#allocation8 + $0x54] sm:$0xf]
        %v1186 = vld [vmem:[#allocation8 + $0x58] sm:$0xf]
        %v1187 = vld [vmem:[#allocation8 + $0x5c] sm:$0xf]
        %v1188 = vld [vmem:[#allocation8 + $0x60] sm:$0xf]
        %v1189 = vld [vmem:[#allocation8 + $0x64] sm:$0xf]
        %v1190 = vld [vmem:[#allocation8 + $0x68] sm:$0xf]
        %v1191 = vld [vmem:[#allocation8 + $0x6c] sm:$0xf]
        %v1192 = vld [vmem:[#allocation8 + $0x70] sm:$0xf]
        %v1193 = vld [vmem:[#allocation8 + $0x74] sm:$0xf]
        %v1194 = vld [vmem:[#allocation8 + $0x78] sm:$0xf]
        %v1195 = vld [vmem:[#allocation8 + $0x7c] sm:$0xf]
        %v1196 = vld [vmem:[#allocation8 + $0x80] sm:$0xf]
        %v1197 = vld [vmem:[#allocation8 + $0x84] sm:$0xf]
        %v1198 = vld [vmem:[#allocation8 + $0x88] sm:$0xf]
        %v1199 = vld [vmem:[#allocation8 + $0x8c] sm:$0xf]
        %v1200 = vld [vmem:[#allocation8 + $0x90] sm:$0xf]
        %v1201 = vld [vmem:[#allocation8 + $0x94] sm:$0xf]
        %v1202 = vld [vmem:[#allocation8 + $0x98] sm:$0xf]
        %v1203 = vld [vmem:[#allocation8 + $0x9c] sm:$0xf]
        %v1204 = vld [vmem:[#allocation8 + $0xa0] sm:$0xf]
        %v1205 = vld [vmem:[#allocation8 + $0xa4] sm:$0xf]
        %v1206 = vld [vmem:[#allocation8 + $0xa8] sm:$0xf]
        %v1207 = vld [vmem:[#allocation8 + $0xac] sm:$0xf]
        %v1208 = vld [vmem:[#allocation8 + $0xb0] sm:$0xf]
        %v1209 = vld [vmem:[#allocation8 + $0xb4] sm:$0xf]
        %v1210 = vld [vmem:[#allocation8 + $0xb8] sm:$0xf]
        %v1211 = vld [vmem:[#allocation8 + $0xbc] sm:$0xf]
        %v1212 = vld [vmem:[%s6] sm:$0x1]
        %v1213 = vld [vmem:[#allocation10] sm:$0xf]
        %v1214 = vld [vmem:[#allocation10 + $0x4] sm:$0xf]
        %v1215 = vld [vmem:[#allocation10 + $0x8] sm:$0xf]
        %v1216 = vld [vmem:[#allocation10 + $0xc] sm:$0xf]
        %v1217 = vld [vmem:[#allocation10 + $0x10] sm:$0xf]
        %v1218 = vld [vmem:[#allocation10 + $0x14] sm:$0xf]
        %v1219 = vld [vmem:[#allocation10 + $0x18] sm:$0xf]
        %v1220 = vld [vmem:[#allocation10 + $0x1c] sm:$0xf]
        %v1221 = vld [vmem:[#allocation10 + $0x20] sm:$0xf]
        %v1222 = vld [vmem:[#allocation10 + $0x24] sm:$0xf]
        %v1223 = vld [vmem:[#allocation10 + $0x28] sm:$0xf]
        %v1224 = vld [vmem:[#allocation10 + $0x2c] sm:$0xf]
        %v1225 = vld [vmem:[#allocation10 + $0x30] sm:$0xf]
        %v1226 = vld [vmem:[#allocation10 + $0x34] sm:$0xf]
        %v1227 = vld [vmem:[#allocation10 + $0x38] sm:$0xf]
        %v1228 = vld [vmem:[#allocation10 + $0x3c] sm:$0xf]
        %v1229 = vld [vmem:[#allocation10 + $0x40] sm:$0xf]
        %v1230 = vld [vmem:[#allocation10 + $0x44] sm:$0xf]
        %v1231 = vld [vmem:[#allocation10 + $0x48] sm:$0xf]
        %v1232 = vld [vmem:[#allocation10 + $0x4c] sm:$0xf]
        %v1233 = vld [vmem:[#allocation10 + $0x50] sm:$0xf]
        %v1234 = vld [vmem:[#allocation10 + $0x54] sm:$0xf]
        %v1235 = vld [vmem:[#allocation10 + $0x58] sm:$0xf]
        %v1236 = vld [vmem:[#allocation10 + $0x5c] sm:$0xf]
        %v1237 = vld [vmem:[#allocation10 + $0x60] sm:$0xf]
        %v1238 = vld [vmem:[#allocation10 + $0x64] sm:$0xf]
        %v1239 = vld [vmem:[#allocation10 + $0x68] sm:$0xf]
        %v1240 = vld [vmem:[#allocation10 + $0x6c] sm:$0xf]
        %v1241 = vld [vmem:[#allocation10 + $0x70] sm:$0xf]
        %v1242 = vld [vmem:[#allocation10 + $0x74] sm:$0xf]
        %v1243 = vld [vmem:[#allocation10 + $0x78] sm:$0xf]
        %v1244 = vld [vmem:[#allocation10 + $0x7c] sm:$0xf]
        %v1245 = vld [vmem:[#allocation10 + $0x80] sm:$0xf]
        %v1246 = vld [vmem:[#allocation10 + $0x84] sm:$0xf]
        %v1247 = vld [vmem:[#allocation10 + $0x88] sm:$0xf]
        %v1248 = vld [vmem:[#allocation10 + $0x8c] sm:$0xf]
        %v1249 = vld [vmem:[#allocation10 + $0x90] sm:$0xf]
        %v1250 = vld [vmem:[#allocation10 + $0x94] sm:$0xf]
        %v1251 = vld [vmem:[#allocation10 + $0x98] sm:$0xf]
        %v1252 = vld [vmem:[#allocation10 + $0x9c] sm:$0xf]
        %v1253 = vld [vmem:[#allocation10 + $0xa0] sm:$0xf]
        %v1254 = vld [vmem:[#allocation10 + $0xa4] sm:$0xf]
        %v1255 = vld [vmem:[#allocation10 + $0xa8] sm:$0xf]
        %v1256 = vld [vmem:[#allocation10 + $0xac] sm:$0xf]
        %v1257 = vld [vmem:[#allocation10 + $0xb0] sm:$0xf]
        %v1258 = vld [vmem:[#allocation10 + $0xb4] sm:$0xf]
        %v1259 = vld [vmem:[#allocation10 + $0xb8] sm:$0xf]
        %v1260 = vld [vmem:[#allocation10 + $0xbc] sm:$0xf]
        %v1261 = vld [vmem:[%s8] sm:$0x1]
        %v1262 = vpack.c.bf16 %v1163, %v1162
        %v1264 = vrot.slane %v1262, 6
        %vm1265 = vcmask 1041408
        %v1267 = vsel %vm1265, 0, %v1264
        %v1270 = vrot.slane %v1267, 1
        %v1271 = vrot.slane %v1264, 1
        %v1272 = vsel %vm667, %v1270, %v1271
        %vm1274 = vcmask 1045504
        %v1275 = vrot.slane %v1267, 2
        %v1276 = vrot.slane %v1264, 2
        %v1277 = vsel %vm1274, %v1275, %v1276
        %v1280 = vlaneseq
        %v1281 = vshrl.u32 %v1280, 7
        %v1282 = vsub.s32 0, %v1281
        %v1283 = vrot.slane %v1212, %v1282
        %v1333 = vunpack.c.l.b16 %v1164
        %v1334 = vunpack.c.l.b16 %v1165
        %v1335 = vunpack.c.l.b16 %v1166
        %v1336 = vunpack.c.l.b16 %v1167
        %v1337 = vunpack.c.l.b16 %v1168
        %v1338 = vunpack.c.l.b16 %v1169
        %v1339 = vunpack.c.l.b16 %v1170
        %v1340 = vunpack.c.l.b16 %v1171
        %v1341 = vunpack.c.l.b16 %v1172
        %v1342 = vunpack.c.l.b16 %v1173
        %v1343 = vunpack.c.l.b16 %v1174
        %v1344 = vunpack.c.l.b16 %v1175
        %v1345 = vunpack.c.l.b16 %v1176
        %v1346 = vunpack.c.l.b16 %v1177
        %v1347 = vunpack.c.l.b16 %v1178
        %v1348 = vunpack.c.l.b16 %v1179
        %v1349 = vunpack.c.l.b16 %v1180
        %v1350 = vunpack.c.l.b16 %v1181
        %v1351 = vunpack.c.l.b16 %v1182
        %v1352 = vunpack.c.l.b16 %v1183
        %v1353 = vunpack.c.l.b16 %v1184
        %v1354 = vunpack.c.l.b16 %v1185
        %v1355 = vunpack.c.l.b16 %v1186
        %v1356 = vunpack.c.l.b16 %v1187
        %v1357 = vunpack.c.l.b16 %v1188
        %v1358 = vunpack.c.l.b16 %v1189
        %v1359 = vunpack.c.l.b16 %v1190
        %v1360 = vunpack.c.l.b16 %v1191
        %v1361 = vunpack.c.l.b16 %v1192
        %v1362 = vunpack.c.l.b16 %v1193
        %v1363 = vunpack.c.l.b16 %v1194
        %v1364 = vunpack.c.l.b16 %v1195
        %v1365 = vunpack.c.l.b16 %v1196
        %v1366 = vunpack.c.l.b16 %v1197
        %v1367 = vunpack.c.l.b16 %v1198
        %v1368 = vunpack.c.l.b16 %v1199
        %v1369 = vunpack.c.l.b16 %v1200
        %v1370 = vunpack.c.l.b16 %v1201
        %v1371 = vunpack.c.l.b16 %v1202
        %v1372 = vunpack.c.l.b16 %v1203
        %v1373 = vunpack.c.l.b16 %v1204
        %v1374 = vunpack.c.l.b16 %v1205
        %v1375 = vunpack.c.l.b16 %v1206
        %v1376 = vunpack.c.l.b16 %v1207
        %v1377 = vunpack.c.l.b16 %v1208
        %v1378 = vunpack.c.l.b16 %v1209
        %v1379 = vunpack.c.l.b16 %v1210
        %v1380 = vunpack.c.l.b16 %v1211
        %v1381 = vpack.c.b16 %v1334, %v1333
        %v1382 = vpack.c.b16 %v1336, %v1335
        %v1383 = vpack.c.b16 %v1338, %v1337
        %v1384 = vpack.c.b16 %v1340, %v1339
        %v1385 = vpack.c.b16 %v1342, %v1341
        %v1386 = vpack.c.b16 %v1344, %v1343
        %v1387 = vpack.c.b16 %v1346, %v1345
        %v1388 = vpack.c.b16 %v1348, %v1347
        %v1389 = vpack.c.b16 %v1350, %v1349
        %v1390 = vpack.c.b16 %v1352, %v1351
        %v1391 = vpack.c.b16 %v1354, %v1353
        %v1392 = vpack.c.b16 %v1356, %v1355
        %v1393 = vpack.c.b16 %v1358, %v1357
        %v1394 = vpack.c.b16 %v1360, %v1359
        %v1395 = vpack.c.b16 %v1362, %v1361
        %v1396 = vpack.c.b16 %v1364, %v1363
        %v1397 = vpack.c.b16 %v1366, %v1365
        %v1398 = vpack.c.b16 %v1368, %v1367
        %v1399 = vpack.c.b16 %v1370, %v1369
        %v1400 = vpack.c.b16 %v1372, %v1371
        %v1401 = vpack.c.b16 %v1374, %v1373
        %v1402 = vpack.c.b16 %v1376, %v1375
        %v1403 = vpack.c.b16 %v1378, %v1377
        %v1404 = vpack.c.b16 %v1380, %v1379
        %1429 = vmatprep.subr.bf16.mxu0 0
        %1430 = vmatpush1.bf16.msra.mxu0 %v1381
        %1431 = vmatprep.subr.bf16.mxu0 0
        %1432 = vmatpush1.bf16.msra.mxu0 %v1382
        %1433 = vmatprep.subr.bf16.mxu0 0
        %1434 = vmatpush1.bf16.msra.mxu0 %v1383
        %1435 = vmatprep.subr.bf16.mxu0 0
        %1436 = vmatpush1.bf16.msra.mxu0 %v1384
        %1437 = vmatprep.subr.bf16.mxu0 0
        %1438 = vmatpush1.bf16.msra.mxu0 %v1385
        %1439 = vmatprep.subr.bf16.mxu0 0
        %1440 = vmatpush1.bf16.msra.mxu0 %v1386
        %1441 = vmatprep.subr.bf16.mxu0 0
        %1442 = vmatpush1.bf16.msra.mxu0 %v1387
        %1443 = vmatprep.subr.bf16.mxu0 0
        %1444 = vmatpush1.bf16.msra.mxu0 %v1388
        %1445 = vmatprep.subr.bf16.mxu0 0
        %1446 = vmatpush1.bf16.msra.mxu0 %v1389
        %1447 = vmatprep.subr.bf16.mxu0 0
        %1448 = vmatpush1.bf16.msra.mxu0 %v1390
        %1449 = vmatprep.subr.bf16.mxu0 0
        %1450 = vmatpush1.bf16.msra.mxu0 %v1391
        %1451 = vmatprep.subr.bf16.mxu0 0
        %1452 = vmatpush1.bf16.msra.mxu0 %v1392
        %1453 = vmatprep.subr.bf16.mxu0 0
        %1454 = vmatpush1.bf16.msra.mxu0 %v1393
        %1455 = vmatprep.subr.bf16.mxu0 0
        %1456 = vmatpush1.bf16.msra.mxu0 %v1394
        %1457 = vmatprep.subr.bf16.mxu0 0
        %1458 = vmatpush1.bf16.msra.mxu0 %v1395
        %1459 = vmatprep.subr.bf16.mxu0 0
        %1460 = vmatpush1.bf16.msra.mxu0 %v1396
        %1461 = vmatprep.mubr.bf16.mxu0 %v1272
        %1462 = vmatmul.mubr.bf16.gmra.mrb[0].mxu0 %v1267
        %v1463 = vpop.f32.mrb[0].mxu0
        %v1464 = vadd.f32 %v1283, %v1463
        %v1465 = vpop.f32.mrb[0].mxu0
        %v1466 = vpop.f32.mrb[0].mxu0
        %v1467 = vadd.f32 %v1283, %v1466
        %v1468 = vpop.f32.mrb[0].mxu0
        %1469 = vdwg.mxu0
        %1470 = vmatprep.subr.bf16.mxu0 0
        %1471 = vmatpush1.bf16.msra.mxu0 %v1397
        %1472 = vmatprep.subr.bf16.mxu0 0
        %1473 = vmatpush1.bf16.msra.mxu0 %v1398
        %1474 = vmatprep.subr.bf16.mxu0 0
        %1475 = vmatpush1.bf16.msra.mxu0 %v1399
        %1476 = vmatprep.subr.bf16.mxu0 0
        %1477 = vmatpush1.bf16.msra.mxu0 %v1400
        %1478 = vmatprep.subr.bf16.mxu0 0
        %1479 = vmatpush1.bf16.msra.mxu0 %v1401
        %1480 = vmatprep.subr.bf16.mxu0 0
        %1481 = vmatpush1.bf16.msra.mxu0 %v1402
        %1482 = vmatprep.subr.bf16.mxu0 0
        %1483 = vmatpush1.bf16.msra.mxu0 %v1403
        %1484 = vmatprep.subr.bf16.mxu0 0
        %1485 = vmatpush1.bf16.msra.mxu0 %v1404
        %1486 = vmatprep.subr.bf16.mxu0 0
        %1487 = vmatpush1.bf16.msra.mxu0 0
        %1488 = vmatprep.subr.bf16.mxu0 0
        %1489 = vmatpush1.bf16.msra.mxu0 0
        %1490 = vmatprep.subr.bf16.mxu0 0
        %1491 = vmatpush1.bf16.msra.mxu0 0
        %1492 = vmatprep.subr.bf16.mxu0 0
        %1493 = vmatpush1.bf16.msra.mxu0 0
        %1494 = vmatprep.subr.bf16.mxu0 0
        %1495 = vmatpush1.bf16.msra.mxu0 0
        %1496 = vmatprep.subr.bf16.mxu0 0
        %1497 = vmatpush1.bf16.msra.mxu0 0
        %1498 = vmatprep.subr.bf16.mxu0 0
        %1499 = vmatpush1.bf16.msra.mxu0 0
        %1500 = vmatprep.subr.bf16.mxu0 0
        %1501 = vmatpush1.bf16.msra.mxu0 0
        %1502 = vmatprep.mubr.bf16.mxu0 0
        %1503 = vmatmul.mubr.bf16.gmra.mrb[0].mxu0 %v1277
        %v1504 = vpop.f32.mrb[0].mxu0
        %v1505 = vadd.f32 %v1464, %v1504
        %v1506 = vpop.f32.mrb[0].mxu0
        %v1507 = vpop.f32.mrb[0].mxu0
        %v1508 = vadd.f32 %v1467, %v1507
        %v1509 = vpop.f32.mrb[0].mxu0
        %1510 = vdwg.mxu0
        %v1511 = vmax.f32 %v1505, 0.0
        %v1512 = vmax.f32 %v1508, 0.0
        %v1513 = vpack.c.bf16 %v1512, %v1511
        %v1515 = vrot.slane %v1513, 6
        %v1517 = vsel %vm1265, 0, %v1515
        %v1520 = vrot.slane %v1517, 1
        %v1521 = vrot.slane %v1515, 1
        %v1522 = vsel %vm667, %v1520, %v1521
        %v1524 = vrot.slane %v1517, 2
        %v1525 = vrot.slane %v1515, 2
        %v1526 = vsel %vm1274, %v1524, %v1525
        %v1529 = vlaneseq
        %v1530 = vshrl.u32 %v1529, 7
        %v1531 = vsub.s32 0, %v1530
        %v1532 = vrot.slane %v1261, %v1531
        %v1582 = vunpack.c.l.b16 %v1213
        %v1583 = vunpack.c.l.b16 %v1214
        %v1584 = vunpack.c.l.b16 %v1215
        %v1585 = vunpack.c.l.b16 %v1216
        %v1586 = vunpack.c.l.b16 %v1217
        %v1587 = vunpack.c.l.b16 %v1218
        %v1588 = vunpack.c.l.b16 %v1219
        %v1589 = vunpack.c.l.b16 %v1220
        %v1590 = vunpack.c.l.b16 %v1221
        %v1591 = vunpack.c.l.b16 %v1222
        %v1592 = vunpack.c.l.b16 %v1223
        %v1593 = vunpack.c.l.b16 %v1224
        %v1594 = vunpack.c.l.b16 %v1225
        %v1595 = vunpack.c.l.b16 %v1226
        %v1596 = vunpack.c.l.b16 %v1227
        %v1597 = vunpack.c.l.b16 %v1228
        %v1598 = vunpack.c.l.b16 %v1229
        %v1599 = vunpack.c.l.b16 %v1230
        %v1600 = vunpack.c.l.b16 %v1231
        %v1601 = vunpack.c.l.b16 %v1232
        %v1602 = vunpack.c.l.b16 %v1233
        %v1603 = vunpack.c.l.b16 %v1234
        %v1604 = vunpack.c.l.b16 %v1235
        %v1605 = vunpack.c.l.b16 %v1236
        %v1606 = vunpack.c.l.b16 %v1237
        %v1607 = vunpack.c.l.b16 %v1238
        %v1608 = vunpack.c.l.b16 %v1239
        %v1609 = vunpack.c.l.b16 %v1240
        %v1610 = vunpack.c.l.b16 %v1241
        %v1611 = vunpack.c.l.b16 %v1242
        %v1612 = vunpack.c.l.b16 %v1243
        %v1613 = vunpack.c.l.b16 %v1244
        %v1614 = vunpack.c.l.b16 %v1245
        %v1615 = vunpack.c.l.b16 %v1246
        %v1616 = vunpack.c.l.b16 %v1247
        %v1617 = vunpack.c.l.b16 %v1248
        %v1618 = vunpack.c.l.b16 %v1249
        %v1619 = vunpack.c.l.b16 %v1250
        %v1620 = vunpack.c.l.b16 %v1251
        %v1621 = vunpack.c.l.b16 %v1252
        %v1622 = vunpack.c.l.b16 %v1253
        %v1623 = vunpack.c.l.b16 %v1254
        %v1624 = vunpack.c.l.b16 %v1255
        %v1625 = vunpack.c.l.b16 %v1256
        %v1626 = vunpack.c.l.b16 %v1257
        %v1627 = vunpack.c.l.b16 %v1258
        %v1628 = vunpack.c.l.b16 %v1259
        %v1629 = vunpack.c.l.b16 %v1260
        %v1630 = vpack.c.b16 %v1583, %v1582
        %v1631 = vpack.c.b16 %v1585, %v1584
        %v1632 = vpack.c.b16 %v1587, %v1586
        %v1633 = vpack.c.b16 %v1589, %v1588
        %v1634 = vpack.c.b16 %v1591, %v1590
        %v1635 = vpack.c.b16 %v1593, %v1592
        %v1636 = vpack.c.b16 %v1595, %v1594
        %v1637 = vpack.c.b16 %v1597, %v1596
        %v1638 = vpack.c.b16 %v1599, %v1598
        %v1639 = vpack.c.b16 %v1601, %v1600
        %v1640 = vpack.c.b16 %v1603, %v1602
        %v1641 = vpack.c.b16 %v1605, %v1604
        %v1642 = vpack.c.b16 %v1607, %v1606
        %v1643 = vpack.c.b16 %v1609, %v1608
        %v1644 = vpack.c.b16 %v1611, %v1610
        %v1645 = vpack.c.b16 %v1613, %v1612
        %v1646 = vpack.c.b16 %v1615, %v1614
        %v1647 = vpack.c.b16 %v1617, %v1616
        %v1648 = vpack.c.b16 %v1619, %v1618
        %v1649 = vpack.c.b16 %v1621, %v1620
        %v1650 = vpack.c.b16 %v1623, %v1622
        %v1651 = vpack.c.b16 %v1625, %v1624
        %v1652 = vpack.c.b16 %v1627, %v1626
        %v1653 = vpack.c.b16 %v1629, %v1628
        %1678 = vmatprep.subr.bf16.mxu0 0
        %1679 = vmatpush1.bf16.msra.mxu0 %v1630
        %1680 = vmatprep.subr.bf16.mxu0 0
        %1681 = vmatpush1.bf16.msra.mxu0 %v1631
        %1682 = vmatprep.subr.bf16.mxu0 0
        %1683 = vmatpush1.bf16.msra.mxu0 %v1632
        %1684 = vmatprep.subr.bf16.mxu0 0
        %1685 = vmatpush1.bf16.msra.mxu0 %v1633
        %1686 = vmatprep.subr.bf16.mxu0 0
        %1687 = vmatpush1.bf16.msra.mxu0 %v1634
        %1688 = vmatprep.subr.bf16.mxu0 0
        %1689 = vmatpush1.bf16.msra.mxu0 %v1635
        %1690 = vmatprep.subr.bf16.mxu0 0
        %1691 = vmatpush1.bf16.msra.mxu0 %v1636
        %1692 = vmatprep.subr.bf16.mxu0 0
        %1693 = vmatpush1.bf16.msra.mxu0 %v1637
        %1694 = vmatprep.subr.bf16.mxu0 0
        %1695 = vmatpush1.bf16.msra.mxu0 %v1638
        %1696 = vmatprep.subr.bf16.mxu0 0
        %1697 = vmatpush1.bf16.msra.mxu0 %v1639
        %1698 = vmatprep.subr.bf16.mxu0 0
        %1699 = vmatpush1.bf16.msra.mxu0 %v1640
        %1700 = vmatprep.subr.bf16.mxu0 0
        %1701 = vmatpush1.bf16.msra.mxu0 %v1641
        %1702 = vmatprep.subr.bf16.mxu0 0
        %1703 = vmatpush1.bf16.msra.mxu0 %v1642
        %1704 = vmatprep.subr.bf16.mxu0 0
        %1705 = vmatpush1.bf16.msra.mxu0 %v1643
        %1706 = vmatprep.subr.bf16.mxu0 0
        %1707 = vmatpush1.bf16.msra.mxu0 %v1644
        %1708 = vmatprep.subr.bf16.mxu0 0
        %1709 = vmatpush1.bf16.msra.mxu0 %v1645
        %1710 = vmatprep.mubr.bf16.mxu0 %v1522
        %1711 = vmatmul.mubr.bf16.gmra.mrb[0].mxu0 %v1517
        %v1712 = vpop.f32.mrb[0].mxu0
        %v1713 = vadd.f32 %v1532, %v1712
        %v1714 = vpop.f32.mrb[0].mxu0
        %v1715 = vpop.f32.mrb[0].mxu0
        %v1716 = vadd.f32 %v1532, %v1715
        %v1717 = vpop.f32.mrb[0].mxu0
        %1718 = vdwg.mxu0
        %1719 = vmatprep.subr.bf16.mxu0 0
        %1720 = vmatpush1.bf16.msra.mxu0 %v1646
        %1721 = vmatprep.subr.bf16.mxu0 0
        %1722 = vmatpush1.bf16.msra.mxu0 %v1647
        %1723 = vmatprep.subr.bf16.mxu0 0
        %1724 = vmatpush1.bf16.msra.mxu0 %v1648
        %1725 = vmatprep.subr.bf16.mxu0 0
        %1726 = vmatpush1.bf16.msra.mxu0 %v1649
        %1727 = vmatprep.subr.bf16.mxu0 0
        %1728 = vmatpush1.bf16.msra.mxu0 %v1650
        %1729 = vmatprep.subr.bf16.mxu0 0
        %1730 = vmatpush1.bf16.msra.mxu0 %v1651
        %1731 = vmatprep.subr.bf16.mxu0 0
        %1732 = vmatpush1.bf16.msra.mxu0 %v1652
        %1733 = vmatprep.subr.bf16.mxu0 0
        %1734 = vmatpush1.bf16.msra.mxu0 %v1653
        %1735 = vmatprep.subr.bf16.mxu0 0
        %1736 = vmatpush1.bf16.msra.mxu0 0
        %1737 = vmatprep.subr.bf16.mxu0 0
        %1738 = vmatpush1.bf16.msra.mxu0 0
        %1739 = vmatprep.subr.bf16.mxu0 0
        %1740 = vmatpush1.bf16.msra.mxu0 0
        %1741 = vmatprep.subr.bf16.mxu0 0
        %1742 = vmatpush1.bf16.msra.mxu0 0
        %1743 = vmatprep.subr.bf16.mxu0 0
        %1744 = vmatpush1.bf16.msra.mxu0 0
        %1745 = vmatprep.subr.bf16.mxu0 0
        %1746 = vmatpush1.bf16.msra.mxu0 0
        %1747 = vmatprep.subr.bf16.mxu0 0
        %1748 = vmatpush1.bf16.msra.mxu0 0
        %1749 = vmatprep.subr.bf16.mxu0 0
        %1750 = vmatpush1.bf16.msra.mxu0 0
        %1751 = vmatprep.mubr.bf16.mxu0 0
        %1752 = vmatmul.mubr.bf16.gmra.mrb[0].mxu0 %v1526
        %v1753 = vpop.f32.mrb[0].mxu0
        %v1754 = vadd.f32 %v1713, %v1753
        %v1755 = vpop.f32.mrb[0].mxu0
        %v1756 = vpop.f32.mrb[0].mxu0
        %v1757 = vadd.f32 %v1716, %v1756
        %v1758 = vpop.f32.mrb[0].mxu0
        %1759 = vdwg.mxu0
        %v1760 = vmax.f32 %v1754, 0.0
        %v1761 = vmax.f32 %v1757, 0.0
        %v1762 = vadd.f32 %v1760, %v1162
        %v1763 = vadd.f32 %v1761, %v1163
        %v1764 = vld [vmem:[#allocation11] sm:$0xff]
        %v1765 = vld [vmem:[#allocation11 + $0x8] sm:$0xff]
        %v1766 = vld [vmem:[#allocation11 + $0x10] sm:$0xff]
        %v1767 = vld [vmem:[#allocation11 + $0x18] sm:$0xff]
        %v1768 = vld [vmem:[#allocation11 + $0x20] sm:$0xff]
        %v1769 = vld [vmem:[#allocation11 + $0x28] sm:$0xff]
        %v1770 = vld [vmem:[#allocation11 + $0x30] sm:$0xff]
        %v1771 = vld [vmem:[#allocation11 + $0x38] sm:$0xff]
        %v1772 = vld [vmem:[#allocation11 + $0x40] sm:$0xff]
        %v1773 = vld [vmem:[#allocation11 + $0x48] sm:$0xff]
        %v1774 = vld [vmem:[#allocation11 + $0x50] sm:$0xff]
        %v1775 = vld [vmem:[#allocation11 + $0x58] sm:$0xff]
        %v1776 = vld [vmem:[#allocation11 + $0x60] sm:$0xff]
        %v1777 = vld [vmem:[#allocation11 + $0x68] sm:$0xff]
        %v1778 = vld [vmem:[#allocation11 + $0x70] sm:$0xff]
        %v1779 = vld [vmem:[#allocation11 + $0x78] sm:$0xff]
        %v1780 = vld [vmem:[#allocation11 + $0x80] sm:$0xff]
        %v1781 = vld [vmem:[#allocation11 + $0x88] sm:$0xff]
        %v1782 = vld [vmem:[#allocation11 + $0x90] sm:$0xff]
        %v1783 = vld [vmem:[#allocation11 + $0x98] sm:$0xff]
        %v1784 = vld [vmem:[#allocation11 + $0xa0] sm:$0xff]
        %v1785 = vld [vmem:[#allocation11 + $0xa8] sm:$0xff]
        %v1786 = vld [vmem:[#allocation11 + $0xb0] sm:$0xff]
        %v1787 = vld [vmem:[#allocation11 + $0xb8] sm:$0xff]
        %v1788 = vld [vmem:[#allocation11 + $0xc0] sm:$0xff]
        %v1789 = vld [vmem:[#allocation11 + $0xc8] sm:$0xff]
        %v1790 = vld [vmem:[#allocation11 + $0xd0] sm:$0xff]
        %v1791 = vld [vmem:[#allocation11 + $0xd8] sm:$0xff]
        %v1792 = vld [vmem:[#allocation11 + $0xe0] sm:$0xff]
        %v1793 = vld [vmem:[#allocation11 + $0xe8] sm:$0xff]
        %v1794 = vld [vmem:[#allocation11 + $0xf0] sm:$0xff]
        %v1795 = vld [vmem:[#allocation11 + $0xf8] sm:$0xff]
        %v1796 = vld [vmem:[#allocation11 + $0x100] sm:$0xff]
        %v1797 = vld [vmem:[#allocation11 + $0x108] sm:$0xff]
        %v1798 = vld [vmem:[#allocation11 + $0x110] sm:$0xff]
        %v1799 = vld [vmem:[#allocation11 + $0x118] sm:$0xff]
        %v1800 = vld [vmem:[#allocation11 + $0x120] sm:$0xff]
        %v1801 = vld [vmem:[#allocation11 + $0x128] sm:$0xff]
        %v1802 = vld [vmem:[#allocation11 + $0x130] sm:$0xff]
        %v1803 = vld [vmem:[#allocation11 + $0x138] sm:$0xff]
        %v1804 = vld [vmem:[#allocation11 + $0x140] sm:$0xff]
        %v1805 = vld [vmem:[#allocation11 + $0x148] sm:$0xff]
        %v1806 = vld [vmem:[#allocation11 + $0x150] sm:$0xff]
        %v1807 = vld [vmem:[#allocation11 + $0x158] sm:$0xff]
        %v1808 = vld [vmem:[#allocation11 + $0x160] sm:$0xff]
        %v1809 = vld [vmem:[#allocation11 + $0x168] sm:$0xff]
        %v1810 = vld [vmem:[#allocation11 + $0x170] sm:$0xff]
        %v1811 = vld [vmem:[#allocation11 + $0x178] sm:$0xff]
        %v1812 = vld [vmem:[%s10] sm:$0x3]
        %v1813 = vld [vmem:[#allocation13] sm:$0xf]
        %v1814 = vld [vmem:[#allocation13 + $0x4] sm:$0xf]
        %v1815 = vld [vmem:[#allocation13 + $0x8] sm:$0xf]
        %v1816 = vld [vmem:[#allocation13 + $0xc] sm:$0xf]
        %v1817 = vld [vmem:[#allocation13 + $0x10] sm:$0xf]
        %v1818 = vld [vmem:[#allocation13 + $0x14] sm:$0xf]
        %v1819 = vld [vmem:[#allocation13 + $0x18] sm:$0xf]
        %v1820 = vld [vmem:[#allocation13 + $0x1c] sm:$0xf]
        %v1821 = vld [vmem:[#allocation13 + $0x20] sm:$0xf]
        %v1822 = vld [vmem:[#allocation13 + $0x24] sm:$0xf]
        %v1823 = vld [vmem:[#allocation13 + $0x28] sm:$0xf]
        %v1824 = vld [vmem:[#allocation13 + $0x2c] sm:$0xf]
        %v1825 = vld [vmem:[#allocation13 + $0x30] sm:$0xf]
        %v1826 = vld [vmem:[#allocation13 + $0x34] sm:$0xf]
        %v1827 = vld [vmem:[#allocation13 + $0x38] sm:$0xf]
        %v1828 = vld [vmem:[#allocation13 + $0x3c] sm:$0xf]
        %v1829 = vld [vmem:[#allocation13 + $0x40] sm:$0xf]
        %v1830 = vld [vmem:[#allocation13 + $0x44] sm:$0xf]
        %v1831 = vld [vmem:[#allocation13 + $0x48] sm:$0xf]
        %v1832 = vld [vmem:[#allocation13 + $0x4c] sm:$0xf]
        %v1833 = vld [vmem:[#allocation13 + $0x50] sm:$0xf]
        %v1834 = vld [vmem:[#allocation13 + $0x54] sm:$0xf]
        %v1835 = vld [vmem:[#allocation13 + $0x58] sm:$0xf]
        %v1836 = vld [vmem:[#allocation13 + $0x5c] sm:$0xf]
        %v1837 = vld [vmem:[#allocation13 + $0x60] sm:$0xf]
        %v1838 = vld [vmem:[#allocation13 + $0x64] sm:$0xf]
        %v1839 = vld [vmem:[#allocation13 + $0x68] sm:$0xf]
        %v1840 = vld [vmem:[#allocation13 + $0x6c] sm:$0xf]
        %v1841 = vld [vmem:[#allocation13 + $0x70] sm:$0xf]
        %v1842 = vld [vmem:[#allocation13 + $0x74] sm:$0xf]
        %v1843 = vld [vmem:[#allocation13 + $0x78] sm:$0xf]
        %v1844 = vld [vmem:[#allocation13 + $0x7c] sm:$0xf]
        %v1845 = vld [vmem:[#allocation13 + $0x80] sm:$0xf]
        %v1846 = vld [vmem:[#allocation13 + $0x84] sm:$0xf]
        %v1847 = vld [vmem:[#allocation13 + $0x88] sm:$0xf]
        %v1848 = vld [vmem:[#allocation13 + $0x8c] sm:$0xf]
        %v1849 = vld [vmem:[#allocation13 + $0x90] sm:$0xf]
        %v1850 = vld [vmem:[#allocation13 + $0x94] sm:$0xf]
        %v1851 = vld [vmem:[#allocation13 + $0x98] sm:$0xf]
        %v1852 = vld [vmem:[#allocation13 + $0x9c] sm:$0xf]
        %v1853 = vld [vmem:[#allocation13 + $0xa0] sm:$0xf]
        %v1854 = vld [vmem:[#allocation13 + $0xa4] sm:$0xf]
        %v1855 = vld [vmem:[#allocation13 + $0xa8] sm:$0xf]
        %v1856 = vld [vmem:[#allocation13 + $0xac] sm:$0xf]
        %v1857 = vld [vmem:[#allocation13 + $0xb0] sm:$0xf]
        %v1858 = vld [vmem:[#allocation13 + $0xb4] sm:$0xf]
        %v1859 = vld [vmem:[#allocation13 + $0xb8] sm:$0xf]
        %v1860 = vld [vmem:[#allocation13 + $0xbc] sm:$0xf]
        %v1861 = vld [vmem:[%s12] sm:$0x1]
        %v1862 = vpack.c.bf16 %v1763, %v1762
        %v1864 = vrot.slane %v1862, 4
        %vm1865 = vcmask 1043456
        %v1867 = vsel %vm1865, 0, %v1864
        %v1870 = vrot.slane %v1867, 2
        %v1871 = vrot.slane %v1864, 2
        %v1872 = vsel %vm1274, %v1870, %v1871
        %vm1874 = vcmask 1043456
        %v1875 = vrot.slane %v1867, 4
        %v1876 = vrot.slane %v1864, 4
        %v1877 = vsel %vm1874, %v1875, %v1876
        %v1880 = vlaneseq
        %v1881 = vshrl.u32 %v1880, 7
        %v1882 = vsub.s32 0, %v1881
        %v1883 = vrot.slane %v1812, %v1882
        %v1884 = vlaneseq
        %v1885 = vshrl.u32 %v1884, 7
        %v1886 = vsub.s32 1, %v1885
        %v1887 = vrot.slane %v1812, %v1886
        %v1938 = vunpack.c.l.b16 %v1764
        %v1939 = vunpack.c.h.b16 %v1764
        %v1940 = vunpack.c.l.b16 %v1765
        %v1941 = vunpack.c.h.b16 %v1765
        %v1942 = vunpack.c.l.b16 %v1766
        %v1943 = vunpack.c.h.b16 %v1766
        %v1944 = vunpack.c.l.b16 %v1767
        %v1945 = vunpack.c.h.b16 %v1767
        %v1946 = vunpack.c.l.b16 %v1768
        %v1947 = vunpack.c.h.b16 %v1768
        %v1948 = vunpack.c.l.b16 %v1769
        %v1949 = vunpack.c.h.b16 %v1769
        %v1950 = vunpack.c.l.b16 %v1770
        %v1951 = vunpack.c.h.b16 %v1770
        %v1952 = vunpack.c.l.b16 %v1771
        %v1953 = vunpack.c.h.b16 %v1771
        %v1954 = vunpack.c.l.b16 %v1772
        %v1955 = vunpack.c.h.b16 %v1772
        %v1956 = vunpack.c.l.b16 %v1773
        %v1957 = vunpack.c.h.b16 %v1773
        %v1958 = vunpack.c.l.b16 %v1774
        %v1959 = vunpack.c.h.b16 %v1774
        %v1960 = vunpack.c.l.b16 %v1775
        %v1961 = vunpack.c.h.b16 %v1775
        %v1962 = vunpack.c.l.b16 %v1776
        %v1963 = vunpack.c.h.b16 %v1776
        %v1964 = vunpack.c.l.b16 %v1777
        %v1965 = vunpack.c.h.b16 %v1777
        %v1966 = vunpack.c.l.b16 %v1778
        %v1967 = vunpack.c.h.b16 %v1778
        %v1968 = vunpack.c.l.b16 %v1779
        %v1969 = vunpack.c.h.b16 %v1779
        %v1970 = vunpack.c.l.b16 %v1780
        %v1971 = vunpack.c.h.b16 %v1780
        %v1972 = vunpack.c.l.b16 %v1781
        %v1973 = vunpack.c.h.b16 %v1781
        %v1974 = vunpack.c.l.b16 %v1782
        %v1975 = vunpack.c.h.b16 %v1782
        %v1976 = vunpack.c.l.b16 %v1783
        %v1977 = vunpack.c.h.b16 %v1783
        %v1978 = vunpack.c.l.b16 %v1784
        %v1979 = vunpack.c.h.b16 %v1784
        %v1980 = vunpack.c.l.b16 %v1785
        %v1981 = vunpack.c.h.b16 %v1785
        %v1982 = vunpack.c.l.b16 %v1786
        %v1983 = vunpack.c.h.b16 %v1786
        %v1984 = vunpack.c.l.b16 %v1787
        %v1985 = vunpack.c.h.b16 %v1787
        %v1986 = vunpack.c.l.b16 %v1788
        %v1987 = vunpack.c.h.b16 %v1788
        %v1988 = vunpack.c.l.b16 %v1789
        %v1989 = vunpack.c.h.b16 %v1789
        %v1990 = vunpack.c.l.b16 %v1790
        %v1991 = vunpack.c.h.b16 %v1790
        %v1992 = vunpack.c.l.b16 %v1791
        %v1993 = vunpack.c.h.b16 %v1791
        %v1994 = vunpack.c.l.b16 %v1792
        %v1995 = vunpack.c.h.b16 %v1792
        %v1996 = vunpack.c.l.b16 %v1793
        %v1997 = vunpack.c.h.b16 %v1793
        %v1998 = vunpack.c.l.b16 %v1794
        %v1999 = vunpack.c.h.b16 %v1794
        %v2000 = vunpack.c.l.b16 %v1795
        %v2001 = vunpack.c.h.b16 %v1795
        %v2002 = vunpack.c.l.b16 %v1796
        %v2003 = vunpack.c.h.b16 %v1796
        %v2004 = vunpack.c.l.b16 %v1797
        %v2005 = vunpack.c.h.b16 %v1797
        %v2006 = vunpack.c.l.b16 %v1798
        %v2007 = vunpack.c.h.b16 %v1798
        %v2008 = vunpack.c.l.b16 %v1799
        %v2009 = vunpack.c.h.b16 %v1799
        %v2010 = vunpack.c.l.b16 %v1800
        %v2011 = vunpack.c.h.b16 %v1800
        %v2012 = vunpack.c.l.b16 %v1801
        %v2013 = vunpack.c.h.b16 %v1801
        %v2014 = vunpack.c.l.b16 %v1802
        %v2015 = vunpack.c.h.b16 %v1802
        %v2016 = vunpack.c.l.b16 %v1803
        %v2017 = vunpack.c.h.b16 %v1803
        %v2018 = vunpack.c.l.b16 %v1804
        %v2019 = vunpack.c.h.b16 %v1804
        %v2020 = vunpack.c.l.b16 %v1805
        %v2021 = vunpack.c.h.b16 %v1805
        %v2022 = vunpack.c.l.b16 %v1806
        %v2023 = vunpack.c.h.b16 %v1806
        %v2024 = vunpack.c.l.b16 %v1807
        %v2025 = vunpack.c.h.b16 %v1807
        %v2026 = vunpack.c.l.b16 %v1808
        %v2027 = vunpack.c.h.b16 %v1808
        %v2028 = vunpack.c.l.b16 %v1809
        %v2029 = vunpack.c.h.b16 %v1809
        %v2030 = vunpack.c.l.b16 %v1810
        %v2031 = vunpack.c.h.b16 %v1810
        %v2032 = vunpack.c.l.b16 %v1811
        %v2033 = vunpack.c.h.b16 %v1811
        %v2034 = vpack.c.b16 %v1940, %v1938
        %v2035 = vpack.c.b16 %v1941, %v1939
        %v2036 = vpack.c.b16 %v1944, %v1942
        %v2037 = vpack.c.b16 %v1945, %v1943
        %v2038 = vpack.c.b16 %v1948, %v1946
        %v2039 = vpack.c.b16 %v1949, %v1947
        %v2040 = vpack.c.b16 %v1952, %v1950
        %v2041 = vpack.c.b16 %v1953, %v1951
        %v2042 = vpack.c.b16 %v1956, %v1954
        %v2043 = vpack.c.b16 %v1957, %v1955
        %v2044 = vpack.c.b16 %v1960, %v1958
        %v2045 = vpack.c.b16 %v1961, %v1959
        %v2046 = vpack.c.b16 %v1964, %v1962
        %v2047 = vpack.c.b16 %v1965, %v1963
        %v2048 = vpack.c.b16 %v1968, %v1966
        %v2049 = vpack.c.b16 %v1969, %v1967
        %v2050 = vpack.c.b16 %v1972, %v1970
        %v2051 = vpack.c.b16 %v1973, %v1971
        %v2052 = vpack.c.b16 %v1976, %v1974
        %v2053 = vpack.c.b16 %v1977, %v1975
        %v2054 = vpack.c.b16 %v1980, %v1978
        %v2055 = vpack.c.b16 %v1981, %v1979
        %v2056 = vpack.c.b16 %v1984, %v1982
        %v2057 = vpack.c.b16 %v1985, %v1983
        %v2058 = vpack.c.b16 %v1988, %v1986
        %v2059 = vpack.c.b16 %v1989, %v1987
        %v2060 = vpack.c.b16 %v1992, %v1990
        %v2061 = vpack.c.b16 %v1993, %v1991
        %v2062 = vpack.c.b16 %v1996, %v1994
        %v2063 = vpack.c.b16 %v1997, %v1995
        %v2064 = vpack.c.b16 %v2000, %v1998
        %v2065 = vpack.c.b16 %v2001, %v1999
        %v2066 = vpack.c.b16 %v2004, %v2002
        %v2067 = vpack.c.b16 %v2005, %v2003
        %v2068 = vpack.c.b16 %v2008, %v2006
        %v2069 = vpack.c.b16 %v2009, %v2007
        %v2070 = vpack.c.b16 %v2012, %v2010
        %v2071 = vpack.c.b16 %v2013, %v2011
        %v2072 = vpack.c.b16 %v2016, %v2014
        %v2073 = vpack.c.b16 %v2017, %v2015
        %v2074 = vpack.c.b16 %v2020, %v2018
        %v2075 = vpack.c.b16 %v2021, %v2019
        %v2076 = vpack.c.b16 %v2024, %v2022
        %v2077 = vpack.c.b16 %v2025, %v2023
        %v2078 = vpack.c.b16 %v2028, %v2026
        %v2079 = vpack.c.b16 %v2029, %v2027
        %v2080 = vpack.c.b16 %v2032, %v2030
        %v2081 = vpack.c.b16 %v2033, %v2031
        %2130 = vmatprep.subr.bf16.mxu0 %v2035
        %2131 = vmatpush1.bf16.msra.mxu0 %v2034
        %2132 = vmatprep.subr.bf16.mxu0 %v2037
        %2133 = vmatpush1.bf16.msra.mxu0 %v2036
        %2134 = vmatprep.subr.bf16.mxu0 %v2039
        %2135 = vmatpush1.bf16.msra.mxu0 %v2038
        %2136 = vmatprep.subr.bf16.mxu0 %v2041
        %2137 = vmatpush1.bf16.msra.mxu0 %v2040
        %2138 = vmatprep.subr.bf16.mxu0 %v2043
        %2139 = vmatpush1.bf16.msra.mxu0 %v2042
        %2140 = vmatprep.subr.bf16.mxu0 %v2045
        %2141 = vmatpush1.bf16.msra.mxu0 %v2044
        %2142 = vmatprep.subr.bf16.mxu0 %v2047
        %2143 = vmatpush1.bf16.msra.mxu0 %v2046
        %2144 = vmatprep.subr.bf16.mxu0 %v2049
        %2145 = vmatpush1.bf16.msra.mxu0 %v2048
        %2146 = vmatprep.subr.bf16.mxu0 %v2051
        %2147 = vmatpush1.bf16.msra.mxu0 %v2050
        %2148 = vmatprep.subr.bf16.mxu0 %v2053
        %2149 = vmatpush1.bf16.msra.mxu0 %v2052
        %2150 = vmatprep.subr.bf16.mxu0 %v2055
        %2151 = vmatpush1.bf16.msra.mxu0 %v2054
        %2152 = vmatprep.subr.bf16.mxu0 %v2057
        %2153 = vmatpush1.bf16.msra.mxu0 %v2056
        %2154 = vmatprep.subr.bf16.mxu0 %v2059
        %2155 = vmatpush1.bf16.msra.mxu0 %v2058
        %2156 = vmatprep.subr.bf16.mxu0 %v2061
        %2157 = vmatpush1.bf16.msra.mxu0 %v2060
        %2158 = vmatprep.subr.bf16.mxu0 %v2063
        %2159 = vmatpush1.bf16.msra.mxu0 %v2062
        %2160 = vmatprep.subr.bf16.mxu0 %v2065
        %2161 = vmatpush1.bf16.msra.mxu0 %v2064
        %2162 = vmatprep.mubr.bf16.mxu0 %v1872
        %2163 = vmatmul.mubr.bf16.gmra.mrb[0].mxu0 %v1867
        %v2164 = vpop.f32.mrb[0].mxu0
        %v2165 = vadd.f32 %v1883, %v2164
        %v2166 = vpop.f32.mrb[0].mxu0
        %v2167 = vadd.f32 %v1887, %v2166
        %v2168 = vpop.f32.mrb[0].mxu0
        %v2169 = vadd.f32 %v1883, %v2168
        %v2170 = vpop.f32.mrb[0].mxu0
        %v2171 = vadd.f32 %v1887, %v2170
        %2172 = vdwg.mxu0
        %2173 = vmatprep.subr.bf16.mxu0 %v2067
        %2174 = vmatpush1.bf16.msra.mxu0 %v2066
        %2175 = vmatprep.subr.bf16.mxu0 %v2069
        %2176 = vmatpush1.bf16.msra.mxu0 %v2068
        %2177 = vmatprep.subr.bf16.mxu0 %v2071
        %2178 = vmatpush1.bf16.msra.mxu0 %v2070
        %2179 = vmatprep.subr.bf16.mxu0 %v2073
        %2180 = vmatpush1.bf16.msra.mxu0 %v2072
        %2181 = vmatprep.subr.bf16.mxu0 %v2075
        %2182 = vmatpush1.bf16.msra.mxu0 %v2074
        %2183 = vmatprep.subr.bf16.mxu0 %v2077
        %2184 = vmatpush1.bf16.msra.mxu0 %v2076
        %2185 = vmatprep.subr.bf16.mxu0 %v2079
        %2186 = vmatpush1.bf16.msra.mxu0 %v2078
        %2187 = vmatprep.subr.bf16.mxu0 %v2081
        %2188 = vmatpush1.bf16.msra.mxu0 %v2080
        %2189 = vmatprep.subr.bf16.mxu0 0
        %2190 = vmatpush1.bf16.msra.mxu0 0
        %2191 = vmatprep.subr.bf16.mxu0 0
        %2192 = vmatpush1.bf16.msra.mxu0 0
        %2193 = vmatprep.subr.bf16.mxu0 0
        %2194 = vmatpush1.bf16.msra.mxu0 0
        %2195 = vmatprep.subr.bf16.mxu0 0
        %2196 = vmatpush1.bf16.msra.mxu0 0
        %2197 = vmatprep.subr.bf16.mxu0 0
        %2198 = vmatpush1.bf16.msra.mxu0 0
        %2199 = vmatprep.subr.bf16.mxu0 0
        %2200 = vmatpush1.bf16.msra.mxu0 0
        %2201 = vmatprep.subr.bf16.mxu0 0
        %2202 = vmatpush1.bf16.msra.mxu0 0
        %2203 = vmatprep.subr.bf16.mxu0 0
        %2204 = vmatpush1.bf16.msra.mxu0 0
        %2205 = vmatprep.mubr.bf16.mxu0 0
        %2206 = vmatmul.mubr.bf16.gmra.mrb[0].mxu0 %v1877
        %v2207 = vpop.f32.mrb[0].mxu0
        %v2208 = vadd.f32 %v2165, %v2207
        %v2209 = vpop.f32.mrb[0].mxu0
        %v2210 = vadd.f32 %v2167, %v2209
        %v2211 = vpop.f32.mrb[0].mxu0
        %v2212 = vadd.f32 %v2169, %v2211
        %v2213 = vpop.f32.mrb[0].mxu0
        %v2214 = vadd.f32 %v2171, %v2213
        %2215 = vdwg.mxu0
        %v2216 = vmax.f32 %v2208, 0.0
        %v2217 = vmax.f32 %v2212, 0.0
        %v2218 = vpack.c.bf16 %v2217, %v2216
        %v2220 = vrot.slane %v2218, 4
        %v2222 = vsel %vm1865, 0, %v2220
        %v2225 = vrot.slane %v2222, 2
        %v2226 = vrot.slane %v2220, 2
        %v2227 = vsel %vm1274, %v2225, %v2226
        %v2229 = vrot.slane %v2222, 4
        %v2230 = vrot.slane %v2220, 4
        %v2231 = vsel %vm1874, %v2229, %v2230
        %v2234 = vlaneseq
        %v2235 = vshrl.u32 %v2234, 7
        %v2236 = vsub.s32 0, %v2235
        %v2237 = vrot.slane %v1861, %v2236
        %v2287 = vunpack.c.l.b16 %v1813
        %v2288 = vunpack.c.l.b16 %v1814
        %v2289 = vunpack.c.l.b16 %v1815
        %v2290 = vunpack.c.l.b16 %v1816
        %v2291 = vunpack.c.l.b16 %v1817
        %v2292 = vunpack.c.l.b16 %v1818
        %v2293 = vunpack.c.l.b16 %v1819
        %v2294 = vunpack.c.l.b16 %v1820
        %v2295 = vunpack.c.l.b16 %v1821
        %v2296 = vunpack.c.l.b16 %v1822
        %v2297 = vunpack.c.l.b16 %v1823
        %v2298 = vunpack.c.l.b16 %v1824
        %v2299 = vunpack.c.l.b16 %v1825
        %v2300 = vunpack.c.l.b16 %v1826
        %v2301 = vunpack.c.l.b16 %v1827
        %v2302 = vunpack.c.l.b16 %v1828
        %v2303 = vunpack.c.l.b16 %v1829
        %v2304 = vunpack.c.l.b16 %v1830
        %v2305 = vunpack.c.l.b16 %v1831
        %v2306 = vunpack.c.l.b16 %v1832
        %v2307 = vunpack.c.l.b16 %v1833
        %v2308 = vunpack.c.l.b16 %v1834
        %v2309 = vunpack.c.l.b16 %v1835
        %v2310 = vunpack.c.l.b16 %v1836
        %v2311 = vunpack.c.l.b16 %v1837
        %v2312 = vunpack.c.l.b16 %v1838
        %v2313 = vunpack.c.l.b16 %v1839
        %v2314 = vunpack.c.l.b16 %v1840
        %v2315 = vunpack.c.l.b16 %v1841
        %v2316 = vunpack.c.l.b16 %v1842
        %v2317 = vunpack.c.l.b16 %v1843
        %v2318 = vunpack.c.l.b16 %v1844
        %v2319 = vunpack.c.l.b16 %v1845
        %v2320 = vunpack.c.l.b16 %v1846
        %v2321 = vunpack.c.l.b16 %v1847
        %v2322 = vunpack.c.l.b16 %v1848
        %v2323 = vunpack.c.l.b16 %v1849
        %v2324 = vunpack.c.l.b16 %v1850
        %v2325 = vunpack.c.l.b16 %v1851
        %v2326 = vunpack.c.l.b16 %v1852
        %v2327 = vunpack.c.l.b16 %v1853
        %v2328 = vunpack.c.l.b16 %v1854
        %v2329 = vunpack.c.l.b16 %v1855
        %v2330 = vunpack.c.l.b16 %v1856
        %v2331 = vunpack.c.l.b16 %v1857
        %v2332 = vunpack.c.l.b16 %v1858
        %v2333 = vunpack.c.l.b16 %v1859
        %v2334 = vunpack.c.l.b16 %v1860
        %v2335 = vpack.c.b16 %v2288, %v2287
        %v2336 = vpack.c.b16 %v2290, %v2289
        %v2337 = vpack.c.b16 %v2292, %v2291
        %v2338 = vpack.c.b16 %v2294, %v2293
        %v2339 = vpack.c.b16 %v2296, %v2295
        %v2340 = vpack.c.b16 %v2298, %v2297
        %v2341 = vpack.c.b16 %v2300, %v2299
        %v2342 = vpack.c.b16 %v2302, %v2301
        %v2343 = vpack.c.b16 %v2304, %v2303
        %v2344 = vpack.c.b16 %v2306, %v2305
        %v2345 = vpack.c.b16 %v2308, %v2307
        %v2346 = vpack.c.b16 %v2310, %v2309
        %v2347 = vpack.c.b16 %v2312, %v2311
        %v2348 = vpack.c.b16 %v2314, %v2313
        %v2349 = vpack.c.b16 %v2316, %v2315
        %v2350 = vpack.c.b16 %v2318, %v2317
        %v2351 = vpack.c.b16 %v2320, %v2319
        %v2352 = vpack.c.b16 %v2322, %v2321
        %v2353 = vpack.c.b16 %v2324, %v2323
        %v2354 = vpack.c.b16 %v2326, %v2325
        %v2355 = vpack.c.b16 %v2328, %v2327
        %v2356 = vpack.c.b16 %v2330, %v2329
        %v2357 = vpack.c.b16 %v2332, %v2331
        %v2358 = vpack.c.b16 %v2334, %v2333
        %2383 = vmatprep.subr.bf16.mxu0 0
        %2384 = vmatpush1.bf16.msra.mxu0 %v2335
        %2385 = vmatprep.subr.bf16.mxu0 0
        %2386 = vmatpush1.bf16.msra.mxu0 %v2336
        %2387 = vmatprep.subr.bf16.mxu0 0
        %2388 = vmatpush1.bf16.msra.mxu0 %v2337
        %2389 = vmatprep.subr.bf16.mxu0 0
        %2390 = vmatpush1.bf16.msra.mxu0 %v2338
        %2391 = vmatprep.subr.bf16.mxu0 0
        %2392 = vmatpush1.bf16.msra.mxu0 %v2339
        %2393 = vmatprep.subr.bf16.mxu0 0
        %2394 = vmatpush1.bf16.msra.mxu0 %v2340
        %2395 = vmatprep.subr.bf16.mxu0 0
        %2396 = vmatpush1.bf16.msra.mxu0 %v2341
        %2397 = vmatprep.subr.bf16.mxu0 0
        %2398 = vmatpush1.bf16.msra.mxu0 %v2342
        %2399 = vmatprep.subr.bf16.mxu0 0
        %2400 = vmatpush1.bf16.msra.mxu0 %v2343
        %2401 = vmatprep.subr.bf16.mxu0 0
        %2402 = vmatpush1.bf16.msra.mxu0 %v2344
        %2403 = vmatprep.subr.bf16.mxu0 0
        %2404 = vmatpush1.bf16.msra.mxu0 %v2345
        %2405 = vmatprep.subr.bf16.mxu0 0
        %2406 = vmatpush1.bf16.msra.mxu0 %v2346
        %2407 = vmatprep.subr.bf16.mxu0 0
        %2408 = vmatpush1.bf16.msra.mxu0 %v2347
        %2409 = vmatprep.subr.bf16.mxu0 0
        %2410 = vmatpush1.bf16.msra.mxu0 %v2348
        %2411 = vmatprep.subr.bf16.mxu0 0
        %2412 = vmatpush1.bf16.msra.mxu0 %v2349
        %2413 = vmatprep.subr.bf16.mxu0 0
        %2414 = vmatpush1.bf16.msra.mxu0 %v2350
        %2415 = vmatprep.mubr.bf16.mxu0 %v2227
        %2416 = vmatmul.mubr.bf16.gmra.mrb[0].mxu0 %v2222
        %v2417 = vpop.f32.mrb[0].mxu0
        %v2418 = vadd.f32 %v2237, %v2417
        %v2419 = vpop.f32.mrb[0].mxu0
        %v2420 = vpop.f32.mrb[0].mxu0
        %v2421 = vadd.f32 %v2237, %v2420
        %v2422 = vpop.f32.mrb[0].mxu0
        %2423 = vdwg.mxu0
        %2424 = vmatprep.subr.bf16.mxu0 0
        %2425 = vmatpush1.bf16.msra.mxu0 %v2351
        %2426 = vmatprep.subr.bf16.mxu0 0
        %2427 = vmatpush1.bf16.msra.mxu0 %v2352
        %2428 = vmatprep.subr.bf16.mxu0 0
        %2429 = vmatpush1.bf16.msra.mxu0 %v2353
        %2430 = vmatprep.subr.bf16.mxu0 0
        %2431 = vmatpush1.bf16.msra.mxu0 %v2354
        %2432 = vmatprep.subr.bf16.mxu0 0
        %2433 = vmatpush1.bf16.msra.mxu0 %v2355
        %2434 = vmatprep.subr.bf16.mxu0 0
        %2435 = vmatpush1.bf16.msra.mxu0 %v2356
        %2436 = vmatprep.subr.bf16.mxu0 0
        %2437 = vmatpush1.bf16.msra.mxu0 %v2357
        %2438 = vmatprep.subr.bf16.mxu0 0
        %2439 = vmatpush1.bf16.msra.mxu0 %v2358
        %2440 = vmatprep.subr.bf16.mxu0 0
        %2441 = vmatpush1.bf16.msra.mxu0 0
        %2442 = vmatprep.subr.bf16.mxu0 0
        %2443 = vmatpush1.bf16.msra.mxu0 0
        %2444 = vmatprep.subr.bf16.mxu0 0
        %2445 = vmatpush1.bf16.msra.mxu0 0
        %2446 = vmatprep.subr.bf16.mxu0 0
        %2447 = vmatpush1.bf16.msra.mxu0 0
        %2448 = vmatprep.subr.bf16.mxu0 0
        %2449 = vmatpush1.bf16.msra.mxu0 0
        %2450 = vmatprep.subr.bf16.mxu0 0
        %2451 = vmatpush1.bf16.msra.mxu0 0
        %2452 = vmatprep.subr.bf16.mxu0 0
        %2453 = vmatpush1.bf16.msra.mxu0 0
        %2454 = vmatprep.subr.bf16.mxu0 0
        %2455 = vmatpush1.bf16.msra.mxu0 0
        %2456 = vmatprep.mubr.bf16.mxu0 0
        %2457 = vmatmul.mubr.bf16.gmra.mrb[0].mxu0 %v2231
        %v2458 = vpop.f32.mrb[0].mxu0
        %v2459 = vadd.f32 %v2418, %v2458
        %v2460 = vpop.f32.mrb[0].mxu0
        %v2461 = vpop.f32.mrb[0].mxu0
        %v2462 = vadd.f32 %v2421, %v2461
        %v2463 = vpop.f32.mrb[0].mxu0
        %2464 = vdwg.mxu0
        %v2465 = vmax.f32 %v2459, 0.0
        %v2466 = vmax.f32 %v2462, 0.0
        %v2467 = vadd.f32 %v2465, %v2210
        %v2468 = vadd.f32 %v2466, %v2214
        %v2469 = vadd.f32 %v2467, %v2468
        %v2470 = vrot.slane %v2469, 4
        %v2471 = vadd.f32 %v2469, %v2470
        %v2472 = vrot.slane %v2471, 2
        %v2473 = vadd.f32 %v2471, %v2472
        %v2474 = vrot.slane %v2473, 1
        %v2475 = vadd.f32 %v2473, %v2474
        %v2476 = vmul.f32 %v2475, 0.0625
        %2477 = vst [vmem:[%s544] sm:$0x1] %v2476
        %s2478 = sand.u32 %s319, 1
        %s2479 = scalar_lea.sflag [#allocation4], %s2478
        %s2480 = sand.u32 %s319, 1
        %s2481 = scalar_lea.vmem [#allocation14], %s2480
        // Predicated region
        $region101: #{tpu_custom_call.1} parent=71 // pred_check
          %p2482 = pneg %p329
        $region102: #{tpu_custom_call.1} parent=71 // pred_check_branch
          %2484 = sbr.rel (%p2482) target = $region104
        $region103: #{tpu_custom_call.1} parent=71 // pred_region
          %s2486 = ssub.s32 16, 16
          %2487 = vsyncadd %s2479, %s2486
          %s2488 = smul.addr %s33, 16
          %s2489 = scalar_lea.hbm %s13, %s2488
          %s2491 = sshll.u32 %s2481, 4
          %s2492 = int_to_ptr.vmem [resolvable:$true] %s2491
          %2494 = dma.vmem_to_hbm [thread:$0]  %s2492, 16, %s2489, %s2479
        $region104: #{tpu_custom_call.1} parent=71 // pred_fallthru
          _
      $region72: #{tpu_custom_call.1} parent=5 // pred_fallthru
        _
      %p2495 = scmp.le.s32.totalorder 2, %s28
      // Predicated region
      $region105: #{tpu_custom_call.1} parent=5 // pred_check
        %p2496 = pneg %p2495
      $region106: #{tpu_custom_call.1} parent=5 // pred_check_branch
        %2498 = sbr.rel (%p2496) target = $region108
      $region107: #{tpu_custom_call.1} parent=5 // pred_region
        %s2499 = ssub.s32 %s28, 2
        // Predicated region
        $region109: #{tpu_custom_call.1} parent=107 // pred_check
          %p2500 = pneg %p335
        $region110: #{tpu_custom_call.1} parent=107 // pred_check_branch
          %2502 = sbr.rel (%p2500) target = $region112
        $region111: #{tpu_custom_call.1} parent=107 // pred_region
          %s2503 = sand.u32 %s320, 1
          %s2504 = scalar_lea.sflag [#allocation4], %s2503
          %s2505 = sand.u32 %s320, 1
          %s2506 = scalar_lea.vmem [#allocation14], %s2505
          %2507 = dma.done %s2504, 16
        $region112: #{tpu_custom_call.1} parent=107 // pred_fallthru
          _
      $region108: #{tpu_custom_call.1} parent=5 // pred_fallthru
        _
    $region6: #{tpu_custom_call.1} parent=1 // loop_footer
      %s32 = sadd.s32 1, %s28
    $region7: #{tpu_custom_call.1} parent=1 // loop_footer_branch
      %27 = sbr.rel target = $region3
    $region8: #{tpu_custom_call.1} parent=1 // loop_exit
      _
    %2508 = vsyncpa [#allocation3], 1
    %s2509 = scalar_lea.sflag [#allocation3], 1
    %2510 = vsyncpa %s2509, 1
    %2511 = vsyncpa [#allocation6], 1
    %2512 = vsyncpa [#allocation9], 1
    %2513 = vsyncpa [#allocation12], 1
    %2514 = vsyncpa [#allocation4], 1
    %s2515 = scalar_lea.sflag [#allocation4], 1
    %2516 = vsyncpa %s2515, 1

</llo_original>
